<compile_context>
chip_gen: v7x
topology: tpu7x:2x2x1
jax: 0.10.0
libtpu: 0.0.40
codegen_flags: <defaults>
</compile_context>

<pallas_src>
import jax
import jax.numpy as jnp
from jax import lax
from jax.experimental import pallas as pl
from jax.experimental.pallas import tpu as pltpu

SQRT2 = 1.4142135623730951   # ComplexBatchNorm affine-weight default
BN_EPS = 1e-5                # ComplexBatchNorm eps default


# ---------------------------------------------------------------------------
# Kernel
# ---------------------------------------------------------------------------
def _bngru_cell_kernel(x_ref, h_ref, wx_ref, wh_ref, bx_ref, bh_ref,
                       bn_ref, out_ref):
    """Fused ComplexBNGRUCell forward.

    x     : (M, 2I)   bf16  [x_re | x_im]   (batch dims flattened to M)
    h     : (M, 2Hd)  bf16  [h_re | h_im]
    wx    : (2I, 6H)  bf16  packed input-side weights  (per-gate [re|im] cols)
    wh    : (2Hd, 6H) bf16  packed hidden-side weights
    bx/bh : (1, 6H)   f32   packed pre-combined biases
    bn    : (6,) f32 SMEM   [eps, w_rr, w_ii, w_ri, b_r, b_i]  (shared BN, C=1)
    out   : (M, 6H)   f32   [r_re|r_im | z_re|z_im | n_re|n_im]
    """
    M = out_ref.shape[0]
    H2 = out_ref.shape[1] // 3           # paired gate width (2H, lane-aligned)
    H = H2 // 2

    eps = bn_ref[0]
    w_rr, w_ii, w_ri = bn_ref[1], bn_ref[2], bn_ref[3]
    b_r, b_i = bn_ref[4], bn_ref[5]

    lane = lax.broadcasted_iota(jnp.int32, (1, H2), 1)
    mask_re = lane < H                    # True on the "real" half of a pair
    inv_n = 1.0 / (M * H)                 # BN divisor: numel / num_channels

    # ---- all 6 complex linears: ONE wide MXU dot per side (N = 6H) ---------
    lx = (jnp.dot(x_ref[...], wx_ref[...], preferred_element_type=jnp.float32)
          + bx_ref[...])                                    # (M, 6H) f32
    lh = (jnp.dot(h_ref[...], wh_ref[...], preferred_element_type=jnp.float32)
          + bh_ref[...])                                    # (M, 6H) f32

    def half_sums(col):                   # col: (1, H2) column sums -> scalars
        s_re = jnp.sum(jnp.where(mask_re, col, 0.0))
        s_im = jnp.sum(col) - s_re
        return s_re, s_im

    def cbn(t):
        """Complex BatchNorm (training-mode batch stats, num_features == 1) on
        a paired (M, 2H) tile [re | im] -> paired (M, 2H) tile.  Raw-moment
        formulation; 2x2 affine folded into the whitening at scalar level."""
        ts = pltpu.roll(t, H, axis=1)                      # [im | re]
        # independent single-pass reductions (overlap on the XLU)
        c1 = jnp.sum(t, axis=0, keepdims=True)             # (1, 2H)
        c2 = jnp.sum(t * t, axis=0, keepdims=True)
        cx = jnp.sum(t * ts, axis=0, keepdims=True)
        s1r, s1i = half_sums(c1)
        s2r, s2i = half_sums(c2)
        sx = jnp.sum(cx) * 0.5                             # sum(re*im)
        mu_r = s1r * inv_n
        mu_i = s1i * inv_n
        crr = s2r * inv_n - mu_r * mu_r + eps
        cii = s2i * inv_n - mu_i * mu_i + eps
        cri = sx * inv_n - mu_r * mu_i
        s = jnp.sqrt(crr * cii - cri * cri)
        tt = jnp.sqrt(crr + cii + 2.0 * s)
        inv_st = 1.0 / (s * tt)
        rrr = (cii + s) * inv_st
        rii = (crr + s) * inv_st
        rri = -cri * inv_st
        # fold affine (w_rr,w_ii,w_ri,b_r,b_i) into the whitening (scalars)
        p_re = w_rr * rrr + w_ri * rri     # coeff of c_re in out_re
        q_re = w_rr * rri + w_ri * rii     # coeff of c_im in out_re
        p_im = w_ri * rri + w_ii * rii     # coeff of c_im in out_im
        q_im = w_ri * rrr + w_ii * rri     # coeff of c_re in out_im
        mu_vec = jnp.where(mask_re, mu_r, mu_i)
        mu_swp = jnp.where(mask_re, mu_i, mu_r)
        p_vec = jnp.where(mask_re, p_re, p_im)
        q_vec = jnp.where(mask_re, q_re, q_im)
        bias_vec = jnp.where(mask_re, b_r, b_i)
        # out = P * centered + Q * swap(centered) + bias  (full-vreg FMAs)
        return p_vec * (t - mu_vec) + q_vec * (ts - mu_swp) + bias_vec

    def sig(v):                            # sigmoid via one EUP tanh
        return 0.5 * jnp.tanh(0.5 * v) + 0.5

    # 128-aligned, 128-wide gate-pair slices (no half-vreg relayout)
    x1, h1 = lx[:, 0:H2],            lh[:, 0:H2]
    x2, h2 = lx[:, H2:2 * H2],       lh[:, H2:2 * H2]
    x3, h3 = lx[:, 2 * H2:3 * H2],   lh[:, 2 * H2:3 * H2]

    # reset gate: r = csigmoid(bn(x_1) + bn(h_1))
    r_pair = sig(cbn(x1) + cbn(h1))
    # update gate: z = csigmoid(bn(h_2) + bn(x_2))
    z_pair = sig(cbn(h2) + cbn(x2))

    # candidate: n = ctanh(bn(bn(x_3) + r * bn(R3(h))))
    bx3 = cbn(x3)
    bh3 = cbn(h3)
    # complex multiply r * bn(R3 h) in the paired layout (rolls hit the XLU)
    r_swp = pltpu.roll(r_pair, H, axis=1)                  # [r_im | r_re]
    b_swp = pltpu.roll(bh3, H, axis=1)                     # [b_im | b_re]
    r_re_dup = jnp.where(mask_re, r_pair, r_swp)           # [r_re | r_re]
    r_im_dup = jnp.where(mask_re, r_swp, r_pair)           # [r_im | r_im]
    sign_vec = jnp.where(mask_re, -1.0, 1.0)
    c_pair = r_re_dup * bh3 + r_im_dup * (b_swp * sign_vec)
    n_pair = jnp.tanh(cbn(bx3 + c_pair))

    # three unmasked 128-aligned stores (lane-dense output slab)
    out_ref[:, 0:H2] = r_pair
    out_ref[:, H2:2 * H2] = z_pair
    out_ref[:, 2 * H2:3 * H2] = n_pair


# ---------------------------------------------------------------------------
# Parameters: torch-default init + one-time packing (no per-call transposes)
# ---------------------------------------------------------------------------
def _torch_linear_init(key, out_features, in_features):
    """torch.nn.Linear default init (kaiming-uniform W, uniform bias)."""
    kw, kb = jax.random.split(key)
    bound = 1.0 / (in_features ** 0.5)
    w = jax.random.uniform(kw, (out_features, in_features), jnp.float32,
                           minval=-bound, maxval=bound)
    b = jax.random.uniform(kb, (out_features,), jnp.float32,
                           minval=-bound, maxval=bound)
    return w, b


def init_raw_params(key, input_length, hidden_length):
    """{name: (w_r, w_i, b_r, b_i)} mirroring the six ComplexLinear layers."""
    names = ("w1", "w2", "w3", "r1", "r2", "r3")
    keys = jax.random.split(key, 2 * len(names))
    raw = {}
    for idx, name in enumerate(names):
        in_f = input_length if name.startswith("w") else hidden_length
        w_r, b_r = _torch_linear_init(keys[2 * idx], hidden_length, in_f)
        w_i, b_i = _torch_linear_init(keys[2 * idx + 1], hidden_length, in_f)
        raw[name] = (w_r, w_i, b_r, b_i)
    return raw


def pack_params(raw, matmul_dtype=jnp.bfloat16, eps=BN_EPS):
    """One-time parameter prep: per side build W (2K, 6H) such that
    [v_re | v_im] @ W = [re(l1)|im(l1) | re(l2)|im(l2) | re(l3)|im(l3)], i.e.
    the complex combine is folded in and each gate occupies one contiguous
    128-lane [re|im] column block; plus a (1, 6H) pre-combined bias row."""
    def pack_side(names):
        blocks, biases = [], []
        for n in names:
            w_r, w_i, b_r, b_i = raw[n]
            top = jnp.concatenate([w_r.T, w_i.T], axis=1)    # rows hit by re(v)
            bot = jnp.concatenate([-w_i.T, w_r.T], axis=1)   # rows hit by im(v)
            blocks.append(jnp.concatenate([top, bot], axis=0))      # (2K, 2H)
            biases.append(jnp.concatenate([b_r - b_i, b_r + b_i]))  # (2H,)
        w = jnp.concatenate(blocks, axis=1).astype(matmul_dtype)    # (2K, 6H)
        b = jnp.concatenate(biases)[None, :].astype(jnp.float32)    # (1, 6H)
        return w, b

    wx, bx = pack_side(("w1", "w2", "w3"))
    wh, bh = pack_side(("r1", "r2", "r3"))
    # shared ComplexBatchNorm2d(1): weight=[sqrt2, sqrt2, 0], bias=[0, 0]
    bn = jnp.array([eps, SQRT2, SQRT2, 0.0, 0.0, 0.0], jnp.float32)
    return {"wx": wx, "wh": wh, "bx": bx, "bh": bh, "bn": bn}


# ---------------------------------------------------------------------------
# Forward wrapper
# ---------------------------------------------------------------------------
@jax.jit
def complex_bn_gru_cell(x, h, params):
    """x: (B, 1, S, I) complex64, h: (B, 1, S, Hd) complex64.
    Returns (r, z, n) complex64, each (B, 1, S, H)."""
    B, C, S, I = x.shape
    assert C == 1, "shared ComplexBatchNorm2d(1) requires channel dim == 1"
    Hd = h.shape[-1]
    H = params["wx"].shape[1] // 6
    M = B * C * S

    # merged [re|im] operands, cast to bf16 here (free in the XLA graph)
    xcat = jnp.concatenate(
        [jnp.real(x).reshape(M, I), jnp.imag(x).reshape(M, I)],
        axis=-1).astype(jnp.bfloat16)
    hcat = jnp.concatenate(
        [jnp.real(h).reshape(M, Hd), jnp.imag(h).reshape(M, Hd)],
        axis=-1).astype(jnp.bfloat16)

    out = pl.pallas_call(
        _bngru_cell_kernel,
        out_shape=jax.ShapeDtypeStruct((M, 6 * H), jnp.float32),
        in_specs=[
            pl.BlockSpec((M, 2 * I), lambda: (0, 0)),
            pl.BlockSpec((M, 2 * Hd), lambda: (0, 0)),
            pl.BlockSpec((2 * I, 6 * H), lambda: (0, 0)),
            pl.BlockSpec((2 * Hd, 6 * H), lambda: (0, 0)),
            pl.BlockSpec((1, 6 * H), lambda: (0, 0)),
            pl.BlockSpec((1, 6 * H), lambda: (0, 0)),
            pl.BlockSpec(memory_space=pltpu.MemorySpace.SMEM),
        ],
        out_specs=pl.BlockSpec((M, 6 * H), lambda: (0, 0)),
        # default scoped-VMEM limit is ample at these sizes; raise it (v6e) or
        # switch to the gridded two-pass variant (v7x) only for large M.
    )(xcat, hcat,
      params["wx"], params["wh"], params["bx"], params["bh"], params["bn"])

    out = out.reshape(B, C, S, 3, 2, H)
    r = (out[..., 0, 0, :] + 1j * out[..., 0, 1, :]).astype(jnp.complex64)
    z = (out[..., 1, 0, :] + 1j * out[..., 1, 1, :]).astype(jnp.complex64)
    n = (out[..., 2, 0, :] + 1j * out[..., 2, 1, :]).astype(jnp.complex64)
    return r, z, n


# ---------------------------------------------------------------------------
# Pure-JAX reference (mirrors the PyTorch module line-by-line)
# ---------------------------------------------------------------------------
def _ref_forward(x, h, raw, cast_dtype=None):
    B, C, S, I = x.shape
    Hd = h.shape[-1]
    M = B * C * S
    xr = jnp.real(x).reshape(M, I).astype(jnp.float32)
    xi = jnp.imag(x).reshape(M, I).astype(jnp.float32)
    hr = jnp.real(h).reshape(M, Hd).astype(jnp.float32)
    hi = jnp.imag(h).reshape(M, Hd).astype(jnp.float32)

    def clin(ar, ai, name):
        w_r, w_i, b_r, b_i = raw[name]
        if cast_dtype is not None:
            ar, ai = ar.astype(cast_dtype), ai.astype(cast_dtype)
            w_r, w_i = w_r.astype(cast_dtype), w_i.astype(cast_dtype)
        rr = jnp.dot(ar, w_r.T, preferred_element_type=jnp.float32)
        ii = jnp.dot(ai, w_i.T, preferred_element_type=jnp.float32)
        ri = jnp.dot(ai, w_r.T, preferred_element_type=jnp.float32)
        ir = jnp.dot(ar, w_i.T, preferred_element_type=jnp.float32)
        return rr - ii + (b_r - b_i), ri + ir + (b_r + b_i)

    def cbn(re, im):
        mu_r, mu_i = re.mean(), im.mean()
        cr, ci = re - mu_r, im - mu_i
        crr = (cr * cr).mean() + BN_EPS
        cii = (ci * ci).mean() + BN_EPS
        cri = (cr * ci).mean()
        s = jnp.sqrt(crr * cii - cri * cri)
        t = jnp.sqrt(crr + cii + 2.0 * s)
        inv_st = 1.0 / (s * t)
        rrr, rii, rri = (cii + s) * inv_st, (crr + s) * inv_st, -cri * inv_st
        nr = rrr * cr + rri * ci
        ni = rii * ci + rri * cr
        return SQRT2 * nr + 0.0 * ni + 0.0, 0.0 * nr + SQRT2 * ni + 0.0

    x1 = clin(xr, xi, "w1"); h1 = clin(hr, hi, "r1")
    bx1, bh1 = cbn(*x1), cbn(*h1)
    r_re = jax.nn.sigmoid(bx1[0] + bh1[0])
    r_im = jax.nn.sigmoid(bx1[1] + bh1[1])

    x2 = clin(xr, xi, "w2"); h2 = clin(hr, hi, "r2")
    bx2, bh2 = cbn(*x2), cbn(*h2)
    z_re = jax.nn.sigmoid(bh2[0] + bx2[0])
    z_im = jax.nn.sigmoid(bh2[1] + bx2[1])

    x3 = clin(xr, xi, "w3"); h3 = clin(hr, hi, "r3")
    bx3, bh3 = cbn(*x3), cbn(*h3)
    c_re = r_re * bh3[0] - r_im * bh3[1]
    c_im = r_re * bh3[1] + r_im * bh3[0]
    inn = cbn(bx3[0] + c_re, bx3[1] + c_im)
    n_re, n_im = jnp.tanh(inn[0]), jnp.tanh(inn[1])

    def to_c(re, im):
        return (re + 1j * im).astype(jnp.complex64).reshape(B, C, S, -1)

    return to_c(r_re, r_im), to_c(z_re, z_im), to_c(n_re, n_im)


# ---------------------------------------------------------------------------
if __name__ == "__main__":
    key = jax.random.PRNGKey(0)
    k_p, k_xr, k_xi, k_hr, k_hi = jax.random.split(key, 5)

    # x: (B, 1, S, input_length), h: (B, 1, S, hidden_length); the channel
    # dim must be 1 because the cell uses a shared ComplexBatchNorm2d(1).
    B, C, S = 2, 1, 8
    input_length, hidden_length = 32, 64

    raw = init_raw_params(k_p, input_length, hidden_length)
    params = pack_params(raw)      # one-time pack / transpose / bf16 cast

    x = (jax.random.normal(k_xr, (B, C, S, input_length), jnp.float32)
         + 1j * jax.random.normal(k_xi, (B, C, S, input_length), jnp.float32)
         ).astype(jnp.complex64)
    h = (jax.random.normal(k_hr, (B, C, S, hidden_length), jnp.float32)
         + 1j * jax.random.normal(k_hi, (B, C, S, hidden_length), jnp.float32)
         ).astype(jnp.complex64)

    r, z, n = jax.block_until_ready(complex_bn_gru_cell(x, h, params))

    # reference 1: matmul operands cast through bf16 like the kernel (tight)
    ref_bf = _ref_forward(x, h, raw, cast_dtype=jnp.bfloat16)
    # reference 2: pure f32 PyTorch-precision reference (loose, bf16 MXU)
    ref_f32 = _ref_forward(x, h, raw, cast_dtype=None)

    for got, want in zip((r, z, n), ref_bf):
        assert got.shape == want.shape and got.dtype == jnp.complex64
        assert jnp.allclose(got, want, atol=1e-3, rtol=1e-3)
    for got, want in zip((r, z, n), ref_f32):
        assert jnp.allclose(got, want, atol=5e-2, rtol=5e-2)

    print("KERNEL_OK")
</pallas_src>

<mosaic_0001>
module attributes {stable_mosaic.version = 11 : i64} {
  func.func @_bngru_cell_kernel(%arg0: memref<16x64xbf16, #tpu.memory_space<vmem>>, %arg1: memref<16x128xbf16, #tpu.memory_space<vmem>>, %arg2: memref<64x384xbf16, #tpu.memory_space<vmem>>, %arg3: memref<128x384xbf16, #tpu.memory_space<vmem>>, %arg4: memref<1x384xf32, #tpu.memory_space<vmem>>, %arg5: memref<1x384xf32, #tpu.memory_space<vmem>>, %arg6: memref<6xf32, #tpu.memory_space<smem>>, %arg7: memref<16x384xf32, #tpu.memory_space<vmem>>) attributes {dimension_semantics = [], scalar_prefetch = 0 : i64, scratch_operands = 0 : i64, tpu.core_type = #tpu.core_type<tc>} {
    %c0 = arith.constant 0 : index
    %0 = memref.load %arg6[%c0] : memref<6xf32, #tpu.memory_space<smem>>
    %c1 = arith.constant 1 : index
    %1 = memref.load %arg6[%c1] : memref<6xf32, #tpu.memory_space<smem>>
    %c2 = arith.constant 2 : index
    %2 = memref.load %arg6[%c2] : memref<6xf32, #tpu.memory_space<smem>>
    %c3 = arith.constant 3 : index
    %3 = memref.load %arg6[%c3] : memref<6xf32, #tpu.memory_space<smem>>
    %c4 = arith.constant 4 : index
    %4 = memref.load %arg6[%c4] : memref<6xf32, #tpu.memory_space<smem>>
    %c5 = arith.constant 5 : index
    %5 = memref.load %arg6[%c5] : memref<6xf32, #tpu.memory_space<smem>>
    %6 = tpu.iota {dimensions = array<i32: 1>} : vector<1x128xi32>
    %c64_i32 = arith.constant 64 : i32
    %7 = vector.broadcast %c64_i32 : i32 to vector<1x128xi32>
    %8 = arith.cmpi slt, %6, %7 : vector<1x128xi32>
    %c0_0 = arith.constant 0 : index
    %c0_1 = arith.constant 0 : index
    %9 = vector.load %arg0[%c0_0, %c0_1] : memref<16x64xbf16, #tpu.memory_space<vmem>>, vector<16x64xbf16>
    %c0_2 = arith.constant 0 : index
    %c0_3 = arith.constant 0 : index
    %10 = vector.load %arg2[%c0_2, %c0_3] : memref<64x384xbf16, #tpu.memory_space<vmem>>, vector<64x384xbf16>
    %cst = arith.constant dense<0.000000e+00> : vector<16x384xf32>
    %11 = tpu.matmul %9, %10, %cst {dimension_numbers = #tpu.dot_dimension_numbers<[1], [0], [0], [1], [0, 0, 1, 1], [], []>} : vector<16x64xbf16>, vector<64x384xbf16>, vector<16x384xf32> -> vector<16x384xf32>
    %c0_4 = arith.constant 0 : index
    %c0_5 = arith.constant 0 : index
    %12 = vector.load %arg4[%c0_4, %c0_5] : memref<1x384xf32, #tpu.memory_space<vmem>>, vector<1x384xf32>
    %13 = vector.broadcast %12 : vector<1x384xf32> to vector<16x384xf32>
    %14 = arith.addf %11, %13 : vector<16x384xf32>
    %c0_6 = arith.constant 0 : index
    %c0_7 = arith.constant 0 : index
    %15 = vector.load %arg1[%c0_6, %c0_7] : memref<16x128xbf16, #tpu.memory_space<vmem>>, vector<16x128xbf16>
    %c0_8 = arith.constant 0 : index
    %c0_9 = arith.constant 0 : index
    %16 = vector.load %arg3[%c0_8, %c0_9] : memref<128x384xbf16, #tpu.memory_space<vmem>>, vector<128x384xbf16>
    %cst_10 = arith.constant dense<0.000000e+00> : vector<16x384xf32>
    %17 = tpu.matmul %15, %16, %cst_10 {dimension_numbers = #tpu.dot_dimension_numbers<[1], [0], [0], [1], [0, 0, 1, 1], [], []>} : vector<16x128xbf16>, vector<128x384xbf16>, vector<16x384xf32> -> vector<16x384xf32>
    %c0_11 = arith.constant 0 : index
    %c0_12 = arith.constant 0 : index
    %18 = vector.load %arg5[%c0_11, %c0_12] : memref<1x384xf32, #tpu.memory_space<vmem>>, vector<1x384xf32>
    %19 = vector.broadcast %18 : vector<1x384xf32> to vector<16x384xf32>
    %20 = arith.addf %17, %19 : vector<16x384xf32>
    %21 = vector.extract_strided_slice %14 {offsets = [0, 0], sizes = [16, 128], strides = [1, 1]} : vector<16x384xf32> to vector<16x128xf32>
    %22 = vector.extract_strided_slice %20 {offsets = [0, 0], sizes = [16, 128], strides = [1, 1]} : vector<16x384xf32> to vector<16x128xf32>
    %23 = vector.extract_strided_slice %14 {offsets = [0, 128], sizes = [16, 128], strides = [1, 1]} : vector<16x384xf32> to vector<16x128xf32>
    %24 = vector.extract_strided_slice %20 {offsets = [0, 128], sizes = [16, 128], strides = [1, 1]} : vector<16x384xf32> to vector<16x128xf32>
    %25 = vector.extract_strided_slice %14 {offsets = [0, 256], sizes = [16, 128], strides = [1, 1]} : vector<16x384xf32> to vector<16x128xf32>
    %26 = vector.extract_strided_slice %20 {offsets = [0, 256], sizes = [16, 128], strides = [1, 1]} : vector<16x384xf32> to vector<16x128xf32>
    %c64_i32_13 = arith.constant 64 : i32
    %27 = tpu.dynamic_rotate %21 by %c64_i32_13 dim 1 : vector<16x128xf32>, i32 -> vector<16x128xf32>
    %cst_14 = arith.constant dense<0.000000e+00> : vector<128xf32>
    %28 = vector.multi_reduction <add>, %21, %cst_14 [0] : vector<16x128xf32> to vector<128xf32>
    %29 = vector.shape_cast %28 : vector<128xf32> to vector<1x128xf32>
    %30 = arith.mulf %21, %21 : vector<16x128xf32>
    %cst_15 = arith.constant dense<0.000000e+00> : vector<128xf32>
    %31 = vector.multi_reduction <add>, %30, %cst_15 [0] : vector<16x128xf32> to vector<128xf32>
    %32 = vector.shape_cast %31 : vector<128xf32> to vector<1x128xf32>
    %33 = arith.mulf %21, %27 : vector<16x128xf32>
    %cst_16 = arith.constant dense<0.000000e+00> : vector<128xf32>
    %34 = vector.multi_reduction <add>, %33, %cst_16 [0] : vector<16x128xf32> to vector<128xf32>
    %35 = vector.shape_cast %34 : vector<128xf32> to vector<1x128xf32>
    %cst_17 = arith.constant 0.000000e+00 : f32
    %36 = vector.broadcast %cst_17 : f32 to vector<1x128xf32>
    %37 = arith.select %8, %29, %36 : vector<1x128xi1>, vector<1x128xf32>
    %38 = vector.shape_cast %37 : vector<1x128xf32> to vector<1x1x128xf32>
    %cst_18 = arith.constant dense<0.000000e+00> : vector<1xf32>
    %39 = vector.multi_reduction <add>, %38, %cst_18 [1, 2] : vector<1x1x128xf32> to vector<1xf32>
    %40 = vector.shape_cast %39 : vector<1xf32> to vector<1x1x1xf32>
    %41 = vector.extract %40[0, 0, 0] : f32 from vector<1x1x1xf32>
    %42 = vector.shape_cast %29 : vector<1x128xf32> to vector<1x1x128xf32>
    %cst_19 = arith.constant dense<0.000000e+00> : vector<1xf32>
    %43 = vector.multi_reduction <add>, %42, %cst_19 [1, 2] : vector<1x1x128xf32> to vector<1xf32>
    %44 = vector.shape_cast %43 : vector<1xf32> to vector<1x1x1xf32>
    %45 = vector.extract %44[0, 0, 0] : f32 from vector<1x1x1xf32>
    %46 = arith.subf %45, %41 : f32
    %cst_20 = arith.constant 0.000000e+00 : f32
    %47 = vector.broadcast %cst_20 : f32 to vector<1x128xf32>
    %48 = arith.select %8, %32, %47 : vector<1x128xi1>, vector<1x128xf32>
    %49 = vector.shape_cast %48 : vector<1x128xf32> to vector<1x1x128xf32>
    %cst_21 = arith.constant dense<0.000000e+00> : vector<1xf32>
    %50 = vector.multi_reduction <add>, %49, %cst_21 [1, 2] : vector<1x1x128xf32> to vector<1xf32>
    %51 = vector.shape_cast %50 : vector<1xf32> to vector<1x1x1xf32>
    %52 = vector.extract %51[0, 0, 0] : f32 from vector<1x1x1xf32>
    %53 = vector.shape_cast %32 : vector<1x128xf32> to vector<1x1x128xf32>
    %cst_22 = arith.constant dense<0.000000e+00> : vector<1xf32>
    %54 = vector.multi_reduction <add>, %53, %cst_22 [1, 2] : vector<1x1x128xf32> to vector<1xf32>
    %55 = vector.shape_cast %54 : vector<1xf32> to vector<1x1x1xf32>
    %56 = vector.extract %55[0, 0, 0] : f32 from vector<1x1x1xf32>
    %57 = arith.subf %56, %52 : f32
    %58 = vector.shape_cast %35 : vector<1x128xf32> to vector<1x1x128xf32>
    %cst_23 = arith.constant dense<0.000000e+00> : vector<1xf32>
    %59 = vector.multi_reduction <add>, %58, %cst_23 [1, 2] : vector<1x1x128xf32> to vector<1xf32>
    %60 = vector.shape_cast %59 : vector<1xf32> to vector<1x1x1xf32>
    %61 = vector.extract %60[0, 0, 0] : f32 from vector<1x1x1xf32>
    %cst_24 = arith.constant 5.000000e-01 : f32
    %62 = arith.mulf %61, %cst_24 : f32
    %cst_25 = arith.constant 9.765625E-4 : f32
    %63 = arith.mulf %41, %cst_25 : f32
    %cst_26 = arith.constant 9.765625E-4 : f32
    %64 = arith.mulf %46, %cst_26 : f32
    %cst_27 = arith.constant 9.765625E-4 : f32
    %65 = arith.mulf %52, %cst_27 : f32
    %66 = arith.mulf %63, %63 : f32
    %67 = arith.subf %65, %66 : f32
    %68 = arith.addf %67, %0 : f32
    %cst_28 = arith.constant 9.765625E-4 : f32
    %69 = arith.mulf %57, %cst_28 : f32
    %70 = arith.mulf %64, %64 : f32
    %71 = arith.subf %69, %70 : f32
    %72 = arith.addf %71, %0 : f32
    %cst_29 = arith.constant 9.765625E-4 : f32
    %73 = arith.mulf %62, %cst_29 : f32
    %74 = arith.mulf %63, %64 : f32
    %75 = arith.subf %73, %74 : f32
    %76 = arith.mulf %68, %72 : f32
    %77 = arith.mulf %75, %75 : f32
    %78 = arith.subf %76, %77 : f32
    %79 = math.sqrt %78 : f32
    %80 = arith.addf %68, %72 : f32
    %cst_30 = arith.constant 2.000000e+00 : f32
    %81 = arith.mulf %cst_30, %79 : f32
    %82 = arith.addf %80, %81 : f32
    %83 = math.sqrt %82 : f32
    %84 = arith.mulf %79, %83 : f32
    %cst_31 = arith.constant 1.000000e+00 : f32
    %85 = arith.divf %cst_31, %84 : f32
    %86 = arith.addf %72, %79 : f32
    %87 = arith.mulf %86, %85 : f32
    %88 = arith.addf %68, %79 : f32
    %89 = arith.mulf %88, %85 : f32
    %cst_32 = arith.constant 0.000000e+00 : f32
    %90 = arith.subf %cst_32, %75 : f32
    %91 = arith.mulf %90, %85 : f32
    %92 = arith.mulf %1, %87 : f32
    %93 = arith.mulf %3, %91 : f32
    %94 = arith.addf %92, %93 : f32
    %95 = arith.mulf %1, %91 : f32
    %96 = arith.mulf %3, %89 : f32
    %97 = arith.addf %95, %96 : f32
    %98 = arith.mulf %3, %91 : f32
    %99 = arith.mulf %2, %89 : f32
    %100 = arith.addf %98, %99 : f32
    %101 = arith.mulf %3, %87 : f32
    %102 = arith.mulf %2, %91 : f32
    %103 = arith.addf %101, %102 : f32
    %104 = vector.broadcast %63 : f32 to vector<1x128xf32>
    %105 = vector.broadcast %64 : f32 to vector<1x128xf32>
    %106 = arith.select %8, %104, %105 : vector<1x128xi1>, vector<1x128xf32>
    %107 = vector.broadcast %64 : f32 to vector<1x128xf32>
    %108 = vector.broadcast %63 : f32 to vector<1x128xf32>
    %109 = arith.select %8, %107, %108 : vector<1x128xi1>, vector<1x128xf32>
    %110 = vector.broadcast %94 : f32 to vector<1x128xf32>
    %111 = vector.broadcast %100 : f32 to vector<1x128xf32>
    %112 = arith.select %8, %110, %111 : vector<1x128xi1>, vector<1x128xf32>
    %113 = vector.broadcast %97 : f32 to vector<1x128xf32>
    %114 = vector.broadcast %103 : f32 to vector<1x128xf32>
    %115 = arith.select %8, %113, %114 : vector<1x128xi1>, vector<1x128xf32>
    %116 = vector.broadcast %4 : f32 to vector<1x128xf32>
    %117 = vector.broadcast %5 : f32 to vector<1x128xf32>
    %118 = arith.select %8, %116, %117 : vector<1x128xi1>, vector<1x128xf32>
    %119 = vector.broadcast %106 : vector<1x128xf32> to vector<16x128xf32>
    %120 = arith.subf %21, %119 : vector<16x128xf32>
    %121 = vector.broadcast %112 : vector<1x128xf32> to vector<16x128xf32>
    %122 = arith.mulf %121, %120 : vector<16x128xf32>
    %123 = vector.broadcast %109 : vector<1x128xf32> to vector<16x128xf32>
    %124 = arith.subf %27, %123 : vector<16x128xf32>
    %125 = vector.broadcast %115 : vector<1x128xf32> to vector<16x128xf32>
    %126 = arith.mulf %125, %124 : vector<16x128xf32>
    %127 = arith.addf %122, %126 : vector<16x128xf32>
    %128 = vector.broadcast %118 : vector<1x128xf32> to vector<16x128xf32>
    %129 = arith.addf %127, %128 : vector<16x128xf32>
    %c64_i32_33 = arith.constant 64 : i32
    %130 = tpu.dynamic_rotate %22 by %c64_i32_33 dim 1 : vector<16x128xf32>, i32 -> vector<16x128xf32>
    %cst_34 = arith.constant dense<0.000000e+00> : vector<128xf32>
    %131 = vector.multi_reduction <add>, %22, %cst_34 [0] : vector<16x128xf32> to vector<128xf32>
    %132 = vector.shape_cast %131 : vector<128xf32> to vector<1x128xf32>
    %133 = arith.mulf %22, %22 : vector<16x128xf32>
    %cst_35 = arith.constant dense<0.000000e+00> : vector<128xf32>
    %134 = vector.multi_reduction <add>, %133, %cst_35 [0] : vector<16x128xf32> to vector<128xf32>
    %135 = vector.shape_cast %134 : vector<128xf32> to vector<1x128xf32>
    %136 = arith.mulf %22, %130 : vector<16x128xf32>
    %cst_36 = arith.constant dense<0.000000e+00> : vector<128xf32>
    %137 = vector.multi_reduction <add>, %136, %cst_36 [0] : vector<16x128xf32> to vector<128xf32>
    %138 = vector.shape_cast %137 : vector<128xf32> to vector<1x128xf32>
    %cst_37 = arith.constant 0.000000e+00 : f32
    %139 = vector.broadcast %cst_37 : f32 to vector<1x128xf32>
    %140 = arith.select %8, %132, %139 : vector<1x128xi1>, vector<1x128xf32>
    %141 = vector.shape_cast %140 : vector<1x128xf32> to vector<1x1x128xf32>
    %cst_38 = arith.constant dense<0.000000e+00> : vector<1xf32>
    %142 = vector.multi_reduction <add>, %141, %cst_38 [1, 2] : vector<1x1x128xf32> to vector<1xf32>
    %143 = vector.shape_cast %142 : vector<1xf32> to vector<1x1x1xf32>
    %144 = vector.extract %143[0, 0, 0] : f32 from vector<1x1x1xf32>
    %145 = vector.shape_cast %132 : vector<1x128xf32> to vector<1x1x128xf32>
    %cst_39 = arith.constant dense<0.000000e+00> : vector<1xf32>
    %146 = vector.multi_reduction <add>, %145, %cst_39 [1, 2] : vector<1x1x128xf32> to vector<1xf32>
    %147 = vector.shape_cast %146 : vector<1xf32> to vector<1x1x1xf32>
    %148 = vector.extract %147[0, 0, 0] : f32 from vector<1x1x1xf32>
    %149 = arith.subf %148, %144 : f32
    %cst_40 = arith.constant 0.000000e+00 : f32
    %150 = vector.broadcast %cst_40 : f32 to vector<1x128xf32>
    %151 = arith.select %8, %135, %150 : vector<1x128xi1>, vector<1x128xf32>
    %152 = vector.shape_cast %151 : vector<1x128xf32> to vector<1x1x128xf32>
    %cst_41 = arith.constant dense<0.000000e+00> : vector<1xf32>
    %153 = vector.multi_reduction <add>, %152, %cst_41 [1, 2] : vector<1x1x128xf32> to vector<1xf32>
    %154 = vector.shape_cast %153 : vector<1xf32> to vector<1x1x1xf32>
    %155 = vector.extract %154[0, 0, 0] : f32 from vector<1x1x1xf32>
    %156 = vector.shape_cast %135 : vector<1x128xf32> to vector<1x1x128xf32>
    %cst_42 = arith.constant dense<0.000000e+00> : vector<1xf32>
    %157 = vector.multi_reduction <add>, %156, %cst_42 [1, 2] : vector<1x1x128xf32> to vector<1xf32>
    %158 = vector.shape_cast %157 : vector<1xf32> to vector<1x1x1xf32>
    %159 = vector.extract %158[0, 0, 0] : f32 from vector<1x1x1xf32>
    %160 = arith.subf %159, %155 : f32
    %161 = vector.shape_cast %138 : vector<1x128xf32> to vector<1x1x128xf32>
    %cst_43 = arith.constant dense<0.000000e+00> : vector<1xf32>
    %162 = vector.multi_reduction <add>, %161, %cst_43 [1, 2] : vector<1x1x128xf32> to vector<1xf32>
    %163 = vector.shape_cast %162 : vector<1xf32> to vector<1x1x1xf32>
    %164 = vector.extract %163[0, 0, 0] : f32 from vector<1x1x1xf32>
    %cst_44 = arith.constant 5.000000e-01 : f32
    %165 = arith.mulf %164, %cst_44 : f32
    %cst_45 = arith.constant 9.765625E-4 : f32
    %166 = arith.mulf %144, %cst_45 : f32
    %cst_46 = arith.constant 9.765625E-4 : f32
    %167 = arith.mulf %149, %cst_46 : f32
    %cst_47 = arith.constant 9.765625E-4 : f32
    %168 = arith.mulf %155, %cst_47 : f32
    %169 = arith.mulf %166, %166 : f32
    %170 = arith.subf %168, %169 : f32
    %171 = arith.addf %170, %0 : f32
    %cst_48 = arith.constant 9.765625E-4 : f32
    %172 = arith.mulf %160, %cst_48 : f32
    %173 = arith.mulf %167, %167 : f32
    %174 = arith.subf %172, %173 : f32
    %175 = arith.addf %174, %0 : f32
    %cst_49 = arith.constant 9.765625E-4 : f32
    %176 = arith.mulf %165, %cst_49 : f32
    %177 = arith.mulf %166, %167 : f32
    %178 = arith.subf %176, %177 : f32
    %179 = arith.mulf %171, %175 : f32
    %180 = arith.mulf %178, %178 : f32
    %181 = arith.subf %179, %180 : f32
    %182 = math.sqrt %181 : f32
    %183 = arith.addf %171, %175 : f32
    %cst_50 = arith.constant 2.000000e+00 : f32
    %184 = arith.mulf %cst_50, %182 : f32
    %185 = arith.addf %183, %184 : f32
    %186 = math.sqrt %185 : f32
    %187 = arith.mulf %182, %186 : f32
    %cst_51 = arith.constant 1.000000e+00 : f32
    %188 = arith.divf %cst_51, %187 : f32
    %189 = arith.addf %175, %182 : f32
    %190 = arith.mulf %189, %188 : f32
    %191 = arith.addf %171, %182 : f32
    %192 = arith.mulf %191, %188 : f32
    %cst_52 = arith.constant 0.000000e+00 : f32
    %193 = arith.subf %cst_52, %178 : f32
    %194 = arith.mulf %193, %188 : f32
    %195 = arith.mulf %1, %190 : f32
    %196 = arith.mulf %3, %194 : f32
    %197 = arith.addf %195, %196 : f32
    %198 = arith.mulf %1, %194 : f32
    %199 = arith.mulf %3, %192 : f32
    %200 = arith.addf %198, %199 : f32
    %201 = arith.mulf %3, %194 : f32
    %202 = arith.mulf %2, %192 : f32
    %203 = arith.addf %201, %202 : f32
    %204 = arith.mulf %3, %190 : f32
    %205 = arith.mulf %2, %194 : f32
    %206 = arith.addf %204, %205 : f32
    %207 = vector.broadcast %166 : f32 to vector<1x128xf32>
    %208 = vector.broadcast %167 : f32 to vector<1x128xf32>
    %209 = arith.select %8, %207, %208 : vector<1x128xi1>, vector<1x128xf32>
    %210 = vector.broadcast %167 : f32 to vector<1x128xf32>
    %211 = vector.broadcast %166 : f32 to vector<1x128xf32>
    %212 = arith.select %8, %210, %211 : vector<1x128xi1>, vector<1x128xf32>
    %213 = vector.broadcast %197 : f32 to vector<1x128xf32>
    %214 = vector.broadcast %203 : f32 to vector<1x128xf32>
    %215 = arith.select %8, %213, %214 : vector<1x128xi1>, vector<1x128xf32>
    %216 = vector.broadcast %200 : f32 to vector<1x128xf32>
    %217 = vector.broadcast %206 : f32 to vector<1x128xf32>
    %218 = arith.select %8, %216, %217 : vector<1x128xi1>, vector<1x128xf32>
    %219 = vector.broadcast %4 : f32 to vector<1x128xf32>
    %220 = vector.broadcast %5 : f32 to vector<1x128xf32>
    %221 = arith.select %8, %219, %220 : vector<1x128xi1>, vector<1x128xf32>
    %222 = vector.broadcast %209 : vector<1x128xf32> to vector<16x128xf32>
    %223 = arith.subf %22, %222 : vector<16x128xf32>
    %224 = vector.broadcast %215 : vector<1x128xf32> to vector<16x128xf32>
    %225 = arith.mulf %224, %223 : vector<16x128xf32>
    %226 = vector.broadcast %212 : vector<1x128xf32> to vector<16x128xf32>
    %227 = arith.subf %130, %226 : vector<16x128xf32>
    %228 = vector.broadcast %218 : vector<1x128xf32> to vector<16x128xf32>
    %229 = arith.mulf %228, %227 : vector<16x128xf32>
    %230 = arith.addf %225, %229 : vector<16x128xf32>
    %231 = vector.broadcast %221 : vector<1x128xf32> to vector<16x128xf32>
    %232 = arith.addf %230, %231 : vector<16x128xf32>
    %233 = arith.addf %129, %232 : vector<16x128xf32>
    %cst_53 = arith.constant 5.000000e-01 : f32
    %234 = vector.broadcast %cst_53 : f32 to vector<16x128xf32>
    %235 = arith.mulf %234, %233 : vector<16x128xf32>
    %236 = math.tanh %235 : vector<16x128xf32>
    %cst_54 = arith.constant 5.000000e-01 : f32
    %237 = vector.broadcast %cst_54 : f32 to vector<16x128xf32>
    %238 = arith.mulf %237, %236 : vector<16x128xf32>
    %cst_55 = arith.constant 5.000000e-01 : f32
    %239 = vector.broadcast %cst_55 : f32 to vector<16x128xf32>
    %240 = arith.addf %238, %239 : vector<16x128xf32>
    %c64_i32_56 = arith.constant 64 : i32
    %241 = tpu.dynamic_rotate %24 by %c64_i32_56 dim 1 : vector<16x128xf32>, i32 -> vector<16x128xf32>
    %cst_57 = arith.constant dense<0.000000e+00> : vector<128xf32>
    %242 = vector.multi_reduction <add>, %24, %cst_57 [0] : vector<16x128xf32> to vector<128xf32>
    %243 = vector.shape_cast %242 : vector<128xf32> to vector<1x128xf32>
    %244 = arith.mulf %24, %24 : vector<16x128xf32>
    %cst_58 = arith.constant dense<0.000000e+00> : vector<128xf32>
    %245 = vector.multi_reduction <add>, %244, %cst_58 [0] : vector<16x128xf32> to vector<128xf32>
    %246 = vector.shape_cast %245 : vector<128xf32> to vector<1x128xf32>
    %247 = arith.mulf %24, %241 : vector<16x128xf32>
    %cst_59 = arith.constant dense<0.000000e+00> : vector<128xf32>
    %248 = vector.multi_reduction <add>, %247, %cst_59 [0] : vector<16x128xf32> to vector<128xf32>
    %249 = vector.shape_cast %248 : vector<128xf32> to vector<1x128xf32>
    %cst_60 = arith.constant 0.000000e+00 : f32
    %250 = vector.broadcast %cst_60 : f32 to vector<1x128xf32>
    %251 = arith.select %8, %243, %250 : vector<1x128xi1>, vector<1x128xf32>
    %252 = vector.shape_cast %251 : vector<1x128xf32> to vector<1x1x128xf32>
    %cst_61 = arith.constant dense<0.000000e+00> : vector<1xf32>
    %253 = vector.multi_reduction <add>, %252, %cst_61 [1, 2] : vector<1x1x128xf32> to vector<1xf32>
    %254 = vector.shape_cast %253 : vector<1xf32> to vector<1x1x1xf32>
    %255 = vector.extract %254[0, 0, 0] : f32 from vector<1x1x1xf32>
    %256 = vector.shape_cast %243 : vector<1x128xf32> to vector<1x1x128xf32>
    %cst_62 = arith.constant dense<0.000000e+00> : vector<1xf32>
    %257 = vector.multi_reduction <add>, %256, %cst_62 [1, 2] : vector<1x1x128xf32> to vector<1xf32>
    %258 = vector.shape_cast %257 : vector<1xf32> to vector<1x1x1xf32>
    %259 = vector.extract %258[0, 0, 0] : f32 from vector<1x1x1xf32>
    %260 = arith.subf %259, %255 : f32
    %cst_63 = arith.constant 0.000000e+00 : f32
    %261 = vector.broadcast %cst_63 : f32 to vector<1x128xf32>
    %262 = arith.select %8, %246, %261 : vector<1x128xi1>, vector<1x128xf32>
    %263 = vector.shape_cast %262 : vector<1x128xf32> to vector<1x1x128xf32>
    %cst_64 = arith.constant dense<0.000000e+00> : vector<1xf32>
    %264 = vector.multi_reduction <add>, %263, %cst_64 [1, 2] : vector<1x1x128xf32> to vector<1xf32>
    %265 = vector.shape_cast %264 : vector<1xf32> to vector<1x1x1xf32>
    %266 = vector.extract %265[0, 0, 0] : f32 from vector<1x1x1xf32>
    %267 = vector.shape_cast %246 : vector<1x128xf32> to vector<1x1x128xf32>
    %cst_65 = arith.constant dense<0.000000e+00> : vector<1xf32>
    %268 = vector.multi_reduction <add>, %267, %cst_65 [1, 2] : vector<1x1x128xf32> to vector<1xf32>
    %269 = vector.shape_cast %268 : vector<1xf32> to vector<1x1x1xf32>
    %270 = vector.extract %269[0, 0, 0] : f32 from vector<1x1x1xf32>
    %271 = arith.subf %270, %266 : f32
    %272 = vector.shape_cast %249 : vector<1x128xf32> to vector<1x1x128xf32>
    %cst_66 = arith.constant dense<0.000000e+00> : vector<1xf32>
    %273 = vector.multi_reduction <add>, %272, %cst_66 [1, 2] : vector<1x1x128xf32> to vector<1xf32>
    %274 = vector.shape_cast %273 : vector<1xf32> to vector<1x1x1xf32>
    %275 = vector.extract %274[0, 0, 0] : f32 from vector<1x1x1xf32>
    %cst_67 = arith.constant 5.000000e-01 : f32
    %276 = arith.mulf %275, %cst_67 : f32
    %cst_68 = arith.constant 9.765625E-4 : f32
    %277 = arith.mulf %255, %cst_68 : f32
    %cst_69 = arith.constant 9.765625E-4 : f32
    %278 = arith.mulf %260, %cst_69 : f32
    %cst_70 = arith.constant 9.765625E-4 : f32
    %279 = arith.mulf %266, %cst_70 : f32
    %280 = arith.mulf %277, %277 : f32
    %281 = arith.subf %279, %280 : f32
    %282 = arith.addf %281, %0 : f32
    %cst_71 = arith.constant 9.765625E-4 : f32
    %283 = arith.mulf %271, %cst_71 : f32
    %284 = arith.mulf %278, %278 : f32
    %285 = arith.subf %283, %284 : f32
    %286 = arith.addf %285, %0 : f32
    %cst_72 = arith.constant 9.765625E-4 : f32
    %287 = arith.mulf %276, %cst_72 : f32
    %288 = arith.mulf %277, %278 : f32
    %289 = arith.subf %287, %288 : f32
    %290 = arith.mulf %282, %286 : f32
    %291 = arith.mulf %289, %289 : f32
    %292 = arith.subf %290, %291 : f32
    %293 = math.sqrt %292 : f32
    %294 = arith.addf %282, %286 : f32
    %cst_73 = arith.constant 2.000000e+00 : f32
    %295 = arith.mulf %cst_73, %293 : f32
    %296 = arith.addf %294, %295 : f32
    %297 = math.sqrt %296 : f32
    %298 = arith.mulf %293, %297 : f32
    %cst_74 = arith.constant 1.000000e+00 : f32
    %299 = arith.divf %cst_74, %298 : f32
    %300 = arith.addf %286, %293 : f32
    %301 = arith.mulf %300, %299 : f32
    %302 = arith.addf %282, %293 : f32
    %303 = arith.mulf %302, %299 : f32
    %cst_75 = arith.constant 0.000000e+00 : f32
    %304 = arith.subf %cst_75, %289 : f32
    %305 = arith.mulf %304, %299 : f32
    %306 = arith.mulf %1, %301 : f32
    %307 = arith.mulf %3, %305 : f32
    %308 = arith.addf %306, %307 : f32
    %309 = arith.mulf %1, %305 : f32
    %310 = arith.mulf %3, %303 : f32
    %311 = arith.addf %309, %310 : f32
    %312 = arith.mulf %3, %305 : f32
    %313 = arith.mulf %2, %303 : f32
    %314 = arith.addf %312, %313 : f32
    %315 = arith.mulf %3, %301 : f32
    %316 = arith.mulf %2, %305 : f32
    %317 = arith.addf %315, %316 : f32
    %318 = vector.broadcast %277 : f32 to vector<1x128xf32>
    %319 = vector.broadcast %278 : f32 to vector<1x128xf32>
    %320 = arith.select %8, %318, %319 : vector<1x128xi1>, vector<1x128xf32>
    %321 = vector.broadcast %278 : f32 to vector<1x128xf32>
    %322 = vector.broadcast %277 : f32 to vector<1x128xf32>
    %323 = arith.select %8, %321, %322 : vector<1x128xi1>, vector<1x128xf32>
    %324 = vector.broadcast %308 : f32 to vector<1x128xf32>
    %325 = vector.broadcast %314 : f32 to vector<1x128xf32>
    %326 = arith.select %8, %324, %325 : vector<1x128xi1>, vector<1x128xf32>
    %327 = vector.broadcast %311 : f32 to vector<1x128xf32>
    %328 = vector.broadcast %317 : f32 to vector<1x128xf32>
    %329 = arith.select %8, %327, %328 : vector<1x128xi1>, vector<1x128xf32>
    %330 = vector.broadcast %4 : f32 to vector<1x128xf32>
    %331 = vector.broadcast %5 : f32 to vector<1x128xf32>
    %332 = arith.select %8, %330, %331 : vector<1x128xi1>, vector<1x128xf32>
    %333 = vector.broadcast %320 : vector<1x128xf32> to vector<16x128xf32>
    %334 = arith.subf %24, %333 : vector<16x128xf32>
    %335 = vector.broadcast %326 : vector<1x128xf32> to vector<16x128xf32>
    %336 = arith.mulf %335, %334 : vector<16x128xf32>
    %337 = vector.broadcast %323 : vector<1x128xf32> to vector<16x128xf32>
    %338 = arith.subf %241, %337 : vector<16x128xf32>
    %339 = vector.broadcast %329 : vector<1x128xf32> to vector<16x128xf32>
    %340 = arith.mulf %339, %338 : vector<16x128xf32>
    %341 = arith.addf %336, %340 : vector<16x128xf32>
    %342 = vector.broadcast %332 : vector<1x128xf32> to vector<16x128xf32>
    %343 = arith.addf %341, %342 : vector<16x128xf32>
    %c64_i32_76 = arith.constant 64 : i32
    %344 = tpu.dynamic_rotate %23 by %c64_i32_76 dim 1 : vector<16x128xf32>, i32 -> vector<16x128xf32>
    %cst_77 = arith.constant dense<0.000000e+00> : vector<128xf32>
    %345 = vector.multi_reduction <add>, %23, %cst_77 [0] : vector<16x128xf32> to vector<128xf32>
    %346 = vector.shape_cast %345 : vector<128xf32> to vector<1x128xf32>
    %347 = arith.mulf %23, %23 : vector<16x128xf32>
    %cst_78 = arith.constant dense<0.000000e+00> : vector<128xf32>
    %348 = vector.multi_reduction <add>, %347, %cst_78 [0] : vector<16x128xf32> to vector<128xf32>
    %349 = vector.shape_cast %348 : vector<128xf32> to vector<1x128xf32>
    %350 = arith.mulf %23, %344 : vector<16x128xf32>
    %cst_79 = arith.constant dense<0.000000e+00> : vector<128xf32>
    %351 = vector.multi_reduction <add>, %350, %cst_79 [0] : vector<16x128xf32> to vector<128xf32>
    %352 = vector.shape_cast %351 : vector<128xf32> to vector<1x128xf32>
    %cst_80 = arith.constant 0.000000e+00 : f32
    %353 = vector.broadcast %cst_80 : f32 to vector<1x128xf32>
    %354 = arith.select %8, %346, %353 : vector<1x128xi1>, vector<1x128xf32>
    %355 = vector.shape_cast %354 : vector<1x128xf32> to vector<1x1x128xf32>
    %cst_81 = arith.constant dense<0.000000e+00> : vector<1xf32>
    %356 = vector.multi_reduction <add>, %355, %cst_81 [1, 2] : vector<1x1x128xf32> to vector<1xf32>
    %357 = vector.shape_cast %356 : vector<1xf32> to vector<1x1x1xf32>
    %358 = vector.extract %357[0, 0, 0] : f32 from vector<1x1x1xf32>
    %359 = vector.shape_cast %346 : vector<1x128xf32> to vector<1x1x128xf32>
    %cst_82 = arith.constant dense<0.000000e+00> : vector<1xf32>
    %360 = vector.multi_reduction <add>, %359, %cst_82 [1, 2] : vector<1x1x128xf32> to vector<1xf32>
    %361 = vector.shape_cast %360 : vector<1xf32> to vector<1x1x1xf32>
    %362 = vector.extract %361[0, 0, 0] : f32 from vector<1x1x1xf32>
    %363 = arith.subf %362, %358 : f32
    %cst_83 = arith.constant 0.000000e+00 : f32
    %364 = vector.broadcast %cst_83 : f32 to vector<1x128xf32>
    %365 = arith.select %8, %349, %364 : vector<1x128xi1>, vector<1x128xf32>
    %366 = vector.shape_cast %365 : vector<1x128xf32> to vector<1x1x128xf32>
    %cst_84 = arith.constant dense<0.000000e+00> : vector<1xf32>
    %367 = vector.multi_reduction <add>, %366, %cst_84 [1, 2] : vector<1x1x128xf32> to vector<1xf32>
    %368 = vector.shape_cast %367 : vector<1xf32> to vector<1x1x1xf32>
    %369 = vector.extract %368[0, 0, 0] : f32 from vector<1x1x1xf32>
    %370 = vector.shape_cast %349 : vector<1x128xf32> to vector<1x1x128xf32>
    %cst_85 = arith.constant dense<0.000000e+00> : vector<1xf32>
    %371 = vector.multi_reduction <add>, %370, %cst_85 [1, 2] : vector<1x1x128xf32> to vector<1xf32>
    %372 = vector.shape_cast %371 : vector<1xf32> to vector<1x1x1xf32>
    %373 = vector.extract %372[0, 0, 0] : f32 from vector<1x1x1xf32>
    %374 = arith.subf %373, %369 : f32
    %375 = vector.shape_cast %352 : vector<1x128xf32> to vector<1x1x128xf32>
    %cst_86 = arith.constant dense<0.000000e+00> : vector<1xf32>
    %376 = vector.multi_reduction <add>, %375, %cst_86 [1, 2] : vector<1x1x128xf32> to vector<1xf32>
    %377 = vector.shape_cast %376 : vector<1xf32> to vector<1x1x1xf32>
    %378 = vector.extract %377[0, 0, 0] : f32 from vector<1x1x1xf32>
    %cst_87 = arith.constant 5.000000e-01 : f32
    %379 = arith.mulf %378, %cst_87 : f32
    %cst_88 = arith.constant 9.765625E-4 : f32
    %380 = arith.mulf %358, %cst_88 : f32
    %cst_89 = arith.constant 9.765625E-4 : f32
    %381 = arith.mulf %363, %cst_89 : f32
    %cst_90 = arith.constant 9.765625E-4 : f32
    %382 = arith.mulf %369, %cst_90 : f32
    %383 = arith.mulf %380, %380 : f32
    %384 = arith.subf %382, %383 : f32
    %385 = arith.addf %384, %0 : f32
    %cst_91 = arith.constant 9.765625E-4 : f32
    %386 = arith.mulf %374, %cst_91 : f32
    %387 = arith.mulf %381, %381 : f32
    %388 = arith.subf %386, %387 : f32
    %389 = arith.addf %388, %0 : f32
    %cst_92 = arith.constant 9.765625E-4 : f32
    %390 = arith.mulf %379, %cst_92 : f32
    %391 = arith.mulf %380, %381 : f32
    %392 = arith.subf %390, %391 : f32
    %393 = arith.mulf %385, %389 : f32
    %394 = arith.mulf %392, %392 : f32
    %395 = arith.subf %393, %394 : f32
    %396 = math.sqrt %395 : f32
    %397 = arith.addf %385, %389 : f32
    %cst_93 = arith.constant 2.000000e+00 : f32
    %398 = arith.mulf %cst_93, %396 : f32
    %399 = arith.addf %397, %398 : f32
    %400 = math.sqrt %399 : f32
    %401 = arith.mulf %396, %400 : f32
    %cst_94 = arith.constant 1.000000e+00 : f32
    %402 = arith.divf %cst_94, %401 : f32
    %403 = arith.addf %389, %396 : f32
    %404 = arith.mulf %403, %402 : f32
    %405 = arith.addf %385, %396 : f32
    %406 = arith.mulf %405, %402 : f32
    %cst_95 = arith.constant 0.000000e+00 : f32
    %407 = arith.subf %cst_95, %392 : f32
    %408 = arith.mulf %407, %402 : f32
    %409 = arith.mulf %1, %404 : f32
    %410 = arith.mulf %3, %408 : f32
    %411 = arith.addf %409, %410 : f32
    %412 = arith.mulf %1, %408 : f32
    %413 = arith.mulf %3, %406 : f32
    %414 = arith.addf %412, %413 : f32
    %415 = arith.mulf %3, %408 : f32
    %416 = arith.mulf %2, %406 : f32
    %417 = arith.addf %415, %416 : f32
    %418 = arith.mulf %3, %404 : f32
    %419 = arith.mulf %2, %408 : f32
    %420 = arith.addf %418, %419 : f32
    %421 = vector.broadcast %380 : f32 to vector<1x128xf32>
    %422 = vector.broadcast %381 : f32 to vector<1x128xf32>
    %423 = arith.select %8, %421, %422 : vector<1x128xi1>, vector<1x128xf32>
    %424 = vector.broadcast %381 : f32 to vector<1x128xf32>
    %425 = vector.broadcast %380 : f32 to vector<1x128xf32>
    %426 = arith.select %8, %424, %425 : vector<1x128xi1>, vector<1x128xf32>
    %427 = vector.broadcast %411 : f32 to vector<1x128xf32>
    %428 = vector.broadcast %417 : f32 to vector<1x128xf32>
    %429 = arith.select %8, %427, %428 : vector<1x128xi1>, vector<1x128xf32>
    %430 = vector.broadcast %414 : f32 to vector<1x128xf32>
    %431 = vector.broadcast %420 : f32 to vector<1x128xf32>
    %432 = arith.select %8, %430, %431 : vector<1x128xi1>, vector<1x128xf32>
    %433 = vector.broadcast %4 : f32 to vector<1x128xf32>
    %434 = vector.broadcast %5 : f32 to vector<1x128xf32>
    %435 = arith.select %8, %433, %434 : vector<1x128xi1>, vector<1x128xf32>
    %436 = vector.broadcast %423 : vector<1x128xf32> to vector<16x128xf32>
    %437 = arith.subf %23, %436 : vector<16x128xf32>
    %438 = vector.broadcast %429 : vector<1x128xf32> to vector<16x128xf32>
    %439 = arith.mulf %438, %437 : vector<16x128xf32>
    %440 = vector.broadcast %426 : vector<1x128xf32> to vector<16x128xf32>
    %441 = arith.subf %344, %440 : vector<16x128xf32>
    %442 = vector.broadcast %432 : vector<1x128xf32> to vector<16x128xf32>
    %443 = arith.mulf %442, %441 : vector<16x128xf32>
    %444 = arith.addf %439, %443 : vector<16x128xf32>
    %445 = vector.broadcast %435 : vector<1x128xf32> to vector<16x128xf32>
    %446 = arith.addf %444, %445 : vector<16x128xf32>
    %447 = arith.addf %343, %446 : vector<16x128xf32>
    %cst_96 = arith.constant 5.000000e-01 : f32
    %448 = vector.broadcast %cst_96 : f32 to vector<16x128xf32>
    %449 = arith.mulf %448, %447 : vector<16x128xf32>
    %450 = math.tanh %449 : vector<16x128xf32>
    %cst_97 = arith.constant 5.000000e-01 : f32
    %451 = vector.broadcast %cst_97 : f32 to vector<16x128xf32>
    %452 = arith.mulf %451, %450 : vector<16x128xf32>
    %cst_98 = arith.constant 5.000000e-01 : f32
    %453 = vector.broadcast %cst_98 : f32 to vector<16x128xf32>
    %454 = arith.addf %452, %453 : vector<16x128xf32>
    %c64_i32_99 = arith.constant 64 : i32
    %455 = tpu.dynamic_rotate %25 by %c64_i32_99 dim 1 : vector<16x128xf32>, i32 -> vector<16x128xf32>
    %cst_100 = arith.constant dense<0.000000e+00> : vector<128xf32>
    %456 = vector.multi_reduction <add>, %25, %cst_100 [0] : vector<16x128xf32> to vector<128xf32>
    %457 = vector.shape_cast %456 : vector<128xf32> to vector<1x128xf32>
    %458 = arith.mulf %25, %25 : vector<16x128xf32>
    %cst_101 = arith.constant dense<0.000000e+00> : vector<128xf32>
    %459 = vector.multi_reduction <add>, %458, %cst_101 [0] : vector<16x128xf32> to vector<128xf32>
    %460 = vector.shape_cast %459 : vector<128xf32> to vector<1x128xf32>
    %461 = arith.mulf %25, %455 : vector<16x128xf32>
    %cst_102 = arith.constant dense<0.000000e+00> : vector<128xf32>
    %462 = vector.multi_reduction <add>, %461, %cst_102 [0] : vector<16x128xf32> to vector<128xf32>
    %463 = vector.shape_cast %462 : vector<128xf32> to vector<1x128xf32>
    %cst_103 = arith.constant 0.000000e+00 : f32
    %464 = vector.broadcast %cst_103 : f32 to vector<1x128xf32>
    %465 = arith.select %8, %457, %464 : vector<1x128xi1>, vector<1x128xf32>
    %466 = vector.shape_cast %465 : vector<1x128xf32> to vector<1x1x128xf32>
    %cst_104 = arith.constant dense<0.000000e+00> : vector<1xf32>
    %467 = vector.multi_reduction <add>, %466, %cst_104 [1, 2] : vector<1x1x128xf32> to vector<1xf32>
    %468 = vector.shape_cast %467 : vector<1xf32> to vector<1x1x1xf32>
    %469 = vector.extract %468[0, 0, 0] : f32 from vector<1x1x1xf32>
    %470 = vector.shape_cast %457 : vector<1x128xf32> to vector<1x1x128xf32>
    %cst_105 = arith.constant dense<0.000000e+00> : vector<1xf32>
    %471 = vector.multi_reduction <add>, %470, %cst_105 [1, 2] : vector<1x1x128xf32> to vector<1xf32>
    %472 = vector.shape_cast %471 : vector<1xf32> to vector<1x1x1xf32>
    %473 = vector.extract %472[0, 0, 0] : f32 from vector<1x1x1xf32>
    %474 = arith.subf %473, %469 : f32
    %cst_106 = arith.constant 0.000000e+00 : f32
    %475 = vector.broadcast %cst_106 : f32 to vector<1x128xf32>
    %476 = arith.select %8, %460, %475 : vector<1x128xi1>, vector<1x128xf32>
    %477 = vector.shape_cast %476 : vector<1x128xf32> to vector<1x1x128xf32>
    %cst_107 = arith.constant dense<0.000000e+00> : vector<1xf32>
    %478 = vector.multi_reduction <add>, %477, %cst_107 [1, 2] : vector<1x1x128xf32> to vector<1xf32>
    %479 = vector.shape_cast %478 : vector<1xf32> to vector<1x1x1xf32>
    %480 = vector.extract %479[0, 0, 0] : f32 from vector<1x1x1xf32>
    %481 = vector.shape_cast %460 : vector<1x128xf32> to vector<1x1x128xf32>
    %cst_108 = arith.constant dense<0.000000e+00> : vector<1xf32>
    %482 = vector.multi_reduction <add>, %481, %cst_108 [1, 2] : vector<1x1x128xf32> to vector<1xf32>
    %483 = vector.shape_cast %482 : vector<1xf32> to vector<1x1x1xf32>
    %484 = vector.extract %483[0, 0, 0] : f32 from vector<1x1x1xf32>
    %485 = arith.subf %484, %480 : f32
    %486 = vector.shape_cast %463 : vector<1x128xf32> to vector<1x1x128xf32>
    %cst_109 = arith.constant dense<0.000000e+00> : vector<1xf32>
    %487 = vector.multi_reduction <add>, %486, %cst_109 [1, 2] : vector<1x1x128xf32> to vector<1xf32>
    %488 = vector.shape_cast %487 : vector<1xf32> to vector<1x1x1xf32>
    %489 = vector.extract %488[0, 0, 0] : f32 from vector<1x1x1xf32>
    %cst_110 = arith.constant 5.000000e-01 : f32
    %490 = arith.mulf %489, %cst_110 : f32
    %cst_111 = arith.constant 9.765625E-4 : f32
    %491 = arith.mulf %469, %cst_111 : f32
    %cst_112 = arith.constant 9.765625E-4 : f32
    %492 = arith.mulf %474, %cst_112 : f32
    %cst_113 = arith.constant 9.765625E-4 : f32
    %493 = arith.mulf %480, %cst_113 : f32
    %494 = arith.mulf %491, %491 : f32
    %495 = arith.subf %493, %494 : f32
    %496 = arith.addf %495, %0 : f32
    %cst_114 = arith.constant 9.765625E-4 : f32
    %497 = arith.mulf %485, %cst_114 : f32
    %498 = arith.mulf %492, %492 : f32
    %499 = arith.subf %497, %498 : f32
    %500 = arith.addf %499, %0 : f32
    %cst_115 = arith.constant 9.765625E-4 : f32
    %501 = arith.mulf %490, %cst_115 : f32
    %502 = arith.mulf %491, %492 : f32
    %503 = arith.subf %501, %502 : f32
    %504 = arith.mulf %496, %500 : f32
    %505 = arith.mulf %503, %503 : f32
    %506 = arith.subf %504, %505 : f32
    %507 = math.sqrt %506 : f32
    %508 = arith.addf %496, %500 : f32
    %cst_116 = arith.constant 2.000000e+00 : f32
    %509 = arith.mulf %cst_116, %507 : f32
    %510 = arith.addf %508, %509 : f32
    %511 = math.sqrt %510 : f32
    %512 = arith.mulf %507, %511 : f32
    %cst_117 = arith.constant 1.000000e+00 : f32
    %513 = arith.divf %cst_117, %512 : f32
    %514 = arith.addf %500, %507 : f32
    %515 = arith.mulf %514, %513 : f32
    %516 = arith.addf %496, %507 : f32
    %517 = arith.mulf %516, %513 : f32
    %cst_118 = arith.constant 0.000000e+00 : f32
    %518 = arith.subf %cst_118, %503 : f32
    %519 = arith.mulf %518, %513 : f32
    %520 = arith.mulf %1, %515 : f32
    %521 = arith.mulf %3, %519 : f32
    %522 = arith.addf %520, %521 : f32
    %523 = arith.mulf %1, %519 : f32
    %524 = arith.mulf %3, %517 : f32
    %525 = arith.addf %523, %524 : f32
    %526 = arith.mulf %3, %519 : f32
    %527 = arith.mulf %2, %517 : f32
    %528 = arith.addf %526, %527 : f32
    %529 = arith.mulf %3, %515 : f32
    %530 = arith.mulf %2, %519 : f32
    %531 = arith.addf %529, %530 : f32
    %532 = vector.broadcast %491 : f32 to vector<1x128xf32>
    %533 = vector.broadcast %492 : f32 to vector<1x128xf32>
    %534 = arith.select %8, %532, %533 : vector<1x128xi1>, vector<1x128xf32>
    %535 = vector.broadcast %492 : f32 to vector<1x128xf32>
    %536 = vector.broadcast %491 : f32 to vector<1x128xf32>
    %537 = arith.select %8, %535, %536 : vector<1x128xi1>, vector<1x128xf32>
    %538 = vector.broadcast %522 : f32 to vector<1x128xf32>
    %539 = vector.broadcast %528 : f32 to vector<1x128xf32>
    %540 = arith.select %8, %538, %539 : vector<1x128xi1>, vector<1x128xf32>
    %541 = vector.broadcast %525 : f32 to vector<1x128xf32>
    %542 = vector.broadcast %531 : f32 to vector<1x128xf32>
    %543 = arith.select %8, %541, %542 : vector<1x128xi1>, vector<1x128xf32>
    %544 = vector.broadcast %4 : f32 to vector<1x128xf32>
    %545 = vector.broadcast %5 : f32 to vector<1x128xf32>
    %546 = arith.select %8, %544, %545 : vector<1x128xi1>, vector<1x128xf32>
    %547 = vector.broadcast %534 : vector<1x128xf32> to vector<16x128xf32>
    %548 = arith.subf %25, %547 : vector<16x128xf32>
    %549 = vector.broadcast %540 : vector<1x128xf32> to vector<16x128xf32>
    %550 = arith.mulf %549, %548 : vector<16x128xf32>
    %551 = vector.broadcast %537 : vector<1x128xf32> to vector<16x128xf32>
    %552 = arith.subf %455, %551 : vector<16x128xf32>
    %553 = vector.broadcast %543 : vector<1x128xf32> to vector<16x128xf32>
    %554 = arith.mulf %553, %552 : vector<16x128xf32>
    %555 = arith.addf %550, %554 : vector<16x128xf32>
    %556 = vector.broadcast %546 : vector<1x128xf32> to vector<16x128xf32>
    %557 = arith.addf %555, %556 : vector<16x128xf32>
    %c64_i32_119 = arith.constant 64 : i32
    %558 = tpu.dynamic_rotate %26 by %c64_i32_119 dim 1 : vector<16x128xf32>, i32 -> vector<16x128xf32>
    %cst_120 = arith.constant dense<0.000000e+00> : vector<128xf32>
    %559 = vector.multi_reduction <add>, %26, %cst_120 [0] : vector<16x128xf32> to vector<128xf32>
    %560 = vector.shape_cast %559 : vector<128xf32> to vector<1x128xf32>
    %561 = arith.mulf %26, %26 : vector<16x128xf32>
    %cst_121 = arith.constant dense<0.000000e+00> : vector<128xf32>
    %562 = vector.multi_reduction <add>, %561, %cst_121 [0] : vector<16x128xf32> to vector<128xf32>
    %563 = vector.shape_cast %562 : vector<128xf32> to vector<1x128xf32>
    %564 = arith.mulf %26, %558 : vector<16x128xf32>
    %cst_122 = arith.constant dense<0.000000e+00> : vector<128xf32>
    %565 = vector.multi_reduction <add>, %564, %cst_122 [0] : vector<16x128xf32> to vector<128xf32>
    %566 = vector.shape_cast %565 : vector<128xf32> to vector<1x128xf32>
    %cst_123 = arith.constant 0.000000e+00 : f32
    %567 = vector.broadcast %cst_123 : f32 to vector<1x128xf32>
    %568 = arith.select %8, %560, %567 : vector<1x128xi1>, vector<1x128xf32>
    %569 = vector.shape_cast %568 : vector<1x128xf32> to vector<1x1x128xf32>
    %cst_124 = arith.constant dense<0.000000e+00> : vector<1xf32>
    %570 = vector.multi_reduction <add>, %569, %cst_124 [1, 2] : vector<1x1x128xf32> to vector<1xf32>
    %571 = vector.shape_cast %570 : vector<1xf32> to vector<1x1x1xf32>
    %572 = vector.extract %571[0, 0, 0] : f32 from vector<1x1x1xf32>
    %573 = vector.shape_cast %560 : vector<1x128xf32> to vector<1x1x128xf32>
    %cst_125 = arith.constant dense<0.000000e+00> : vector<1xf32>
    %574 = vector.multi_reduction <add>, %573, %cst_125 [1, 2] : vector<1x1x128xf32> to vector<1xf32>
    %575 = vector.shape_cast %574 : vector<1xf32> to vector<1x1x1xf32>
    %576 = vector.extract %575[0, 0, 0] : f32 from vector<1x1x1xf32>
    %577 = arith.subf %576, %572 : f32
    %cst_126 = arith.constant 0.000000e+00 : f32
    %578 = vector.broadcast %cst_126 : f32 to vector<1x128xf32>
    %579 = arith.select %8, %563, %578 : vector<1x128xi1>, vector<1x128xf32>
    %580 = vector.shape_cast %579 : vector<1x128xf32> to vector<1x1x128xf32>
    %cst_127 = arith.constant dense<0.000000e+00> : vector<1xf32>
    %581 = vector.multi_reduction <add>, %580, %cst_127 [1, 2] : vector<1x1x128xf32> to vector<1xf32>
    %582 = vector.shape_cast %581 : vector<1xf32> to vector<1x1x1xf32>
    %583 = vector.extract %582[0, 0, 0] : f32 from vector<1x1x1xf32>
    %584 = vector.shape_cast %563 : vector<1x128xf32> to vector<1x1x128xf32>
    %cst_128 = arith.constant dense<0.000000e+00> : vector<1xf32>
    %585 = vector.multi_reduction <add>, %584, %cst_128 [1, 2] : vector<1x1x128xf32> to vector<1xf32>
    %586 = vector.shape_cast %585 : vector<1xf32> to vector<1x1x1xf32>
    %587 = vector.extract %586[0, 0, 0] : f32 from vector<1x1x1xf32>
    %588 = arith.subf %587, %583 : f32
    %589 = vector.shape_cast %566 : vector<1x128xf32> to vector<1x1x128xf32>
    %cst_129 = arith.constant dense<0.000000e+00> : vector<1xf32>
    %590 = vector.multi_reduction <add>, %589, %cst_129 [1, 2] : vector<1x1x128xf32> to vector<1xf32>
    %591 = vector.shape_cast %590 : vector<1xf32> to vector<1x1x1xf32>
    %592 = vector.extract %591[0, 0, 0] : f32 from vector<1x1x1xf32>
    %cst_130 = arith.constant 5.000000e-01 : f32
    %593 = arith.mulf %592, %cst_130 : f32
    %cst_131 = arith.constant 9.765625E-4 : f32
    %594 = arith.mulf %572, %cst_131 : f32
    %cst_132 = arith.constant 9.765625E-4 : f32
    %595 = arith.mulf %577, %cst_132 : f32
    %cst_133 = arith.constant 9.765625E-4 : f32
    %596 = arith.mulf %583, %cst_133 : f32
    %597 = arith.mulf %594, %594 : f32
    %598 = arith.subf %596, %597 : f32
    %599 = arith.addf %598, %0 : f32
    %cst_134 = arith.constant 9.765625E-4 : f32
    %600 = arith.mulf %588, %cst_134 : f32
    %601 = arith.mulf %595, %595 : f32
    %602 = arith.subf %600, %601 : f32
    %603 = arith.addf %602, %0 : f32
    %cst_135 = arith.constant 9.765625E-4 : f32
    %604 = arith.mulf %593, %cst_135 : f32
    %605 = arith.mulf %594, %595 : f32
    %606 = arith.subf %604, %605 : f32
    %607 = arith.mulf %599, %603 : f32
    %608 = arith.mulf %606, %606 : f32
    %609 = arith.subf %607, %608 : f32
    %610 = math.sqrt %609 : f32
    %611 = arith.addf %599, %603 : f32
    %cst_136 = arith.constant 2.000000e+00 : f32
    %612 = arith.mulf %cst_136, %610 : f32
    %613 = arith.addf %611, %612 : f32
    %614 = math.sqrt %613 : f32
    %615 = arith.mulf %610, %614 : f32
    %cst_137 = arith.constant 1.000000e+00 : f32
    %616 = arith.divf %cst_137, %615 : f32
    %617 = arith.addf %603, %610 : f32
    %618 = arith.mulf %617, %616 : f32
    %619 = arith.addf %599, %610 : f32
    %620 = arith.mulf %619, %616 : f32
    %cst_138 = arith.constant 0.000000e+00 : f32
    %621 = arith.subf %cst_138, %606 : f32
    %622 = arith.mulf %621, %616 : f32
    %623 = arith.mulf %1, %618 : f32
    %624 = arith.mulf %3, %622 : f32
    %625 = arith.addf %623, %624 : f32
    %626 = arith.mulf %1, %622 : f32
    %627 = arith.mulf %3, %620 : f32
    %628 = arith.addf %626, %627 : f32
    %629 = arith.mulf %3, %622 : f32
    %630 = arith.mulf %2, %620 : f32
    %631 = arith.addf %629, %630 : f32
    %632 = arith.mulf %3, %618 : f32
    %633 = arith.mulf %2, %622 : f32
    %634 = arith.addf %632, %633 : f32
    %635 = vector.broadcast %594 : f32 to vector<1x128xf32>
    %636 = vector.broadcast %595 : f32 to vector<1x128xf32>
    %637 = arith.select %8, %635, %636 : vector<1x128xi1>, vector<1x128xf32>
    %638 = vector.broadcast %595 : f32 to vector<1x128xf32>
    %639 = vector.broadcast %594 : f32 to vector<1x128xf32>
    %640 = arith.select %8, %638, %639 : vector<1x128xi1>, vector<1x128xf32>
    %641 = vector.broadcast %625 : f32 to vector<1x128xf32>
    %642 = vector.broadcast %631 : f32 to vector<1x128xf32>
    %643 = arith.select %8, %641, %642 : vector<1x128xi1>, vector<1x128xf32>
    %644 = vector.broadcast %628 : f32 to vector<1x128xf32>
    %645 = vector.broadcast %634 : f32 to vector<1x128xf32>
    %646 = arith.select %8, %644, %645 : vector<1x128xi1>, vector<1x128xf32>
    %647 = vector.broadcast %4 : f32 to vector<1x128xf32>
    %648 = vector.broadcast %5 : f32 to vector<1x128xf32>
    %649 = arith.select %8, %647, %648 : vector<1x128xi1>, vector<1x128xf32>
    %650 = vector.broadcast %637 : vector<1x128xf32> to vector<16x128xf32>
    %651 = arith.subf %26, %650 : vector<16x128xf32>
    %652 = vector.broadcast %643 : vector<1x128xf32> to vector<16x128xf32>
    %653 = arith.mulf %652, %651 : vector<16x128xf32>
    %654 = vector.broadcast %640 : vector<1x128xf32> to vector<16x128xf32>
    %655 = arith.subf %558, %654 : vector<16x128xf32>
    %656 = vector.broadcast %646 : vector<1x128xf32> to vector<16x128xf32>
    %657 = arith.mulf %656, %655 : vector<16x128xf32>
    %658 = arith.addf %653, %657 : vector<16x128xf32>
    %659 = vector.broadcast %649 : vector<1x128xf32> to vector<16x128xf32>
    %660 = arith.addf %658, %659 : vector<16x128xf32>
    %c64_i32_139 = arith.constant 64 : i32
    %661 = tpu.dynamic_rotate %240 by %c64_i32_139 dim 1 : vector<16x128xf32>, i32 -> vector<16x128xf32>
    %c64_i32_140 = arith.constant 64 : i32
    %662 = tpu.dynamic_rotate %660 by %c64_i32_140 dim 1 : vector<16x128xf32>, i32 -> vector<16x128xf32>
    %663 = vector.shape_cast %8 : vector<1x128xi1> to vector<1x128xi1>
    %664 = vector.broadcast %663 : vector<1x128xi1> to vector<16x128xi1>
    %665 = arith.select %664, %240, %661 : vector<16x128xi1>, vector<16x128xf32>
    %666 = vector.shape_cast %8 : vector<1x128xi1> to vector<1x128xi1>
    %667 = vector.broadcast %666 : vector<1x128xi1> to vector<16x128xi1>
    %668 = arith.select %667, %661, %240 : vector<16x128xi1>, vector<16x128xf32>
    %cst_141 = arith.constant -1.000000e+00 : f32
    %cst_142 = arith.constant 1.000000e+00 : f32
    %669 = vector.broadcast %cst_141 : f32 to vector<1x128xf32>
    %670 = vector.broadcast %cst_142 : f32 to vector<1x128xf32>
    %671 = arith.select %8, %669, %670 : vector<1x128xi1>, vector<1x128xf32>
    %672 = arith.mulf %665, %660 : vector<16x128xf32>
    %673 = vector.broadcast %671 : vector<1x128xf32> to vector<16x128xf32>
    %674 = arith.mulf %662, %673 : vector<16x128xf32>
    %675 = arith.mulf %668, %674 : vector<16x128xf32>
    %676 = arith.addf %672, %675 : vector<16x128xf32>
    %677 = arith.addf %557, %676 : vector<16x128xf32>
    %c64_i32_143 = arith.constant 64 : i32
    %678 = tpu.dynamic_rotate %677 by %c64_i32_143 dim 1 : vector<16x128xf32>, i32 -> vector<16x128xf32>
    %cst_144 = arith.constant dense<0.000000e+00> : vector<128xf32>
    %679 = vector.multi_reduction <add>, %677, %cst_144 [0] : vector<16x128xf32> to vector<128xf32>
    %680 = vector.shape_cast %679 : vector<128xf32> to vector<1x128xf32>
    %681 = arith.mulf %677, %677 : vector<16x128xf32>
    %cst_145 = arith.constant dense<0.000000e+00> : vector<128xf32>
    %682 = vector.multi_reduction <add>, %681, %cst_145 [0] : vector<16x128xf32> to vector<128xf32>
    %683 = vector.shape_cast %682 : vector<128xf32> to vector<1x128xf32>
    %684 = arith.mulf %677, %678 : vector<16x128xf32>
    %cst_146 = arith.constant dense<0.000000e+00> : vector<128xf32>
    %685 = vector.multi_reduction <add>, %684, %cst_146 [0] : vector<16x128xf32> to vector<128xf32>
    %686 = vector.shape_cast %685 : vector<128xf32> to vector<1x128xf32>
    %cst_147 = arith.constant 0.000000e+00 : f32
    %687 = vector.broadcast %cst_147 : f32 to vector<1x128xf32>
    %688 = arith.select %8, %680, %687 : vector<1x128xi1>, vector<1x128xf32>
    %689 = vector.shape_cast %688 : vector<1x128xf32> to vector<1x1x128xf32>
    %cst_148 = arith.constant dense<0.000000e+00> : vector<1xf32>
    %690 = vector.multi_reduction <add>, %689, %cst_148 [1, 2] : vector<1x1x128xf32> to vector<1xf32>
    %691 = vector.shape_cast %690 : vector<1xf32> to vector<1x1x1xf32>
    %692 = vector.extract %691[0, 0, 0] : f32 from vector<1x1x1xf32>
    %693 = vector.shape_cast %680 : vector<1x128xf32> to vector<1x1x128xf32>
    %cst_149 = arith.constant dense<0.000000e+00> : vector<1xf32>
    %694 = vector.multi_reduction <add>, %693, %cst_149 [1, 2] : vector<1x1x128xf32> to vector<1xf32>
    %695 = vector.shape_cast %694 : vector<1xf32> to vector<1x1x1xf32>
    %696 = vector.extract %695[0, 0, 0] : f32 from vector<1x1x1xf32>
    %697 = arith.subf %696, %692 : f32
    %cst_150 = arith.constant 0.000000e+00 : f32
    %698 = vector.broadcast %cst_150 : f32 to vector<1x128xf32>
    %699 = arith.select %8, %683, %698 : vector<1x128xi1>, vector<1x128xf32>
    %700 = vector.shape_cast %699 : vector<1x128xf32> to vector<1x1x128xf32>
    %cst_151 = arith.constant dense<0.000000e+00> : vector<1xf32>
    %701 = vector.multi_reduction <add>, %700, %cst_151 [1, 2] : vector<1x1x128xf32> to vector<1xf32>
    %702 = vector.shape_cast %701 : vector<1xf32> to vector<1x1x1xf32>
    %703 = vector.extract %702[0, 0, 0] : f32 from vector<1x1x1xf32>
    %704 = vector.shape_cast %683 : vector<1x128xf32> to vector<1x1x128xf32>
    %cst_152 = arith.constant dense<0.000000e+00> : vector<1xf32>
    %705 = vector.multi_reduction <add>, %704, %cst_152 [1, 2] : vector<1x1x128xf32> to vector<1xf32>
    %706 = vector.shape_cast %705 : vector<1xf32> to vector<1x1x1xf32>
    %707 = vector.extract %706[0, 0, 0] : f32 from vector<1x1x1xf32>
    %708 = arith.subf %707, %703 : f32
    %709 = vector.shape_cast %686 : vector<1x128xf32> to vector<1x1x128xf32>
    %cst_153 = arith.constant dense<0.000000e+00> : vector<1xf32>
    %710 = vector.multi_reduction <add>, %709, %cst_153 [1, 2] : vector<1x1x128xf32> to vector<1xf32>
    %711 = vector.shape_cast %710 : vector<1xf32> to vector<1x1x1xf32>
    %712 = vector.extract %711[0, 0, 0] : f32 from vector<1x1x1xf32>
    %cst_154 = arith.constant 5.000000e-01 : f32
    %713 = arith.mulf %712, %cst_154 : f32
    %cst_155 = arith.constant 9.765625E-4 : f32
    %714 = arith.mulf %692, %cst_155 : f32
    %cst_156 = arith.constant 9.765625E-4 : f32
    %715 = arith.mulf %697, %cst_156 : f32
    %cst_157 = arith.constant 9.765625E-4 : f32
    %716 = arith.mulf %703, %cst_157 : f32
    %717 = arith.mulf %714, %714 : f32
    %718 = arith.subf %716, %717 : f32
    %719 = arith.addf %718, %0 : f32
    %cst_158 = arith.constant 9.765625E-4 : f32
    %720 = arith.mulf %708, %cst_158 : f32
    %721 = arith.mulf %715, %715 : f32
    %722 = arith.subf %720, %721 : f32
    %723 = arith.addf %722, %0 : f32
    %cst_159 = arith.constant 9.765625E-4 : f32
    %724 = arith.mulf %713, %cst_159 : f32
    %725 = arith.mulf %714, %715 : f32
    %726 = arith.subf %724, %725 : f32
    %727 = arith.mulf %719, %723 : f32
    %728 = arith.mulf %726, %726 : f32
    %729 = arith.subf %727, %728 : f32
    %730 = math.sqrt %729 : f32
    %731 = arith.addf %719, %723 : f32
    %cst_160 = arith.constant 2.000000e+00 : f32
    %732 = arith.mulf %cst_160, %730 : f32
    %733 = arith.addf %731, %732 : f32
    %734 = math.sqrt %733 : f32
    %735 = arith.mulf %730, %734 : f32
    %cst_161 = arith.constant 1.000000e+00 : f32
    %736 = arith.divf %cst_161, %735 : f32
    %737 = arith.addf %723, %730 : f32
    %738 = arith.mulf %737, %736 : f32
    %739 = arith.addf %719, %730 : f32
    %740 = arith.mulf %739, %736 : f32
    %cst_162 = arith.constant 0.000000e+00 : f32
    %741 = arith.subf %cst_162, %726 : f32
    %742 = arith.mulf %741, %736 : f32
    %743 = arith.mulf %1, %738 : f32
    %744 = arith.mulf %3, %742 : f32
    %745 = arith.addf %743, %744 : f32
    %746 = arith.mulf %1, %742 : f32
    %747 = arith.mulf %3, %740 : f32
    %748 = arith.addf %746, %747 : f32
    %749 = arith.mulf %3, %742 : f32
    %750 = arith.mulf %2, %740 : f32
    %751 = arith.addf %749, %750 : f32
    %752 = arith.mulf %3, %738 : f32
    %753 = arith.mulf %2, %742 : f32
    %754 = arith.addf %752, %753 : f32
    %755 = vector.broadcast %714 : f32 to vector<1x128xf32>
    %756 = vector.broadcast %715 : f32 to vector<1x128xf32>
    %757 = arith.select %8, %755, %756 : vector<1x128xi1>, vector<1x128xf32>
    %758 = vector.broadcast %715 : f32 to vector<1x128xf32>
    %759 = vector.broadcast %714 : f32 to vector<1x128xf32>
    %760 = arith.select %8, %758, %759 : vector<1x128xi1>, vector<1x128xf32>
    %761 = vector.broadcast %745 : f32 to vector<1x128xf32>
    %762 = vector.broadcast %751 : f32 to vector<1x128xf32>
    %763 = arith.select %8, %761, %762 : vector<1x128xi1>, vector<1x128xf32>
    %764 = vector.broadcast %748 : f32 to vector<1x128xf32>
    %765 = vector.broadcast %754 : f32 to vector<1x128xf32>
    %766 = arith.select %8, %764, %765 : vector<1x128xi1>, vector<1x128xf32>
    %767 = vector.broadcast %4 : f32 to vector<1x128xf32>
    %768 = vector.broadcast %5 : f32 to vector<1x128xf32>
    %769 = arith.select %8, %767, %768 : vector<1x128xi1>, vector<1x128xf32>
    %770 = vector.broadcast %757 : vector<1x128xf32> to vector<16x128xf32>
    %771 = arith.subf %677, %770 : vector<16x128xf32>
    %772 = vector.broadcast %763 : vector<1x128xf32> to vector<16x128xf32>
    %773 = arith.mulf %772, %771 : vector<16x128xf32>
    %774 = vector.broadcast %760 : vector<1x128xf32> to vector<16x128xf32>
    %775 = arith.subf %678, %774 : vector<16x128xf32>
    %776 = vector.broadcast %766 : vector<1x128xf32> to vector<16x128xf32>
    %777 = arith.mulf %776, %775 : vector<16x128xf32>
    %778 = arith.addf %773, %777 : vector<16x128xf32>
    %779 = vector.broadcast %769 : vector<1x128xf32> to vector<16x128xf32>
    %780 = arith.addf %778, %779 : vector<16x128xf32>
    %781 = math.tanh %780 : vector<16x128xf32>
    %c0_163 = arith.constant 0 : index
    %c0_164 = arith.constant 0 : index
    %782 = vector.load %arg7[%c0_163, %c0_164] : memref<16x384xf32, #tpu.memory_space<vmem>>, vector<16x128xf32>
    tpu.vector_store %arg7[%c0_163, %c0_164], %240 {strides = array<i32>} : memref<16x384xf32, #tpu.memory_space<vmem>>, vector<16x128xf32>,
    %c0_165 = arith.constant 0 : index
    %c128 = arith.constant 128 : index
    %783 = vector.load %arg7[%c0_165, %c128] : memref<16x384xf32, #tpu.memory_space<vmem>>, vector<16x128xf32>
    tpu.vector_store %arg7[%c0_165, %c128], %454 {strides = array<i32>} : memref<16x384xf32, #tpu.memory_space<vmem>>, vector<16x128xf32>,
    %c0_166 = arith.constant 0 : index
    %c256 = arith.constant 256 : index
    %784 = vector.load %arg7[%c0_166, %c256] : memref<16x384xf32, #tpu.memory_space<vmem>>, vector<16x128xf32>
    tpu.vector_store %arg7[%c0_166, %c256], %781 {strides = array<i32>} : memref<16x384xf32, #tpu.memory_space<vmem>>, vector<16x128xf32>,
    return
  }
}

</mosaic_0001>

<llo_original>
// kernel: custom-call.1
$region0: #{custom-call.1}
  %s0 = inlined_call_operand.hbm [shape: c64[2,1,8,32], index: 0, kind: input, shape index: {}]
  %s1 = inlined_call_operand.vmem [shape: f32[2,1,8,32], index: 1, kind: output, shape index: {}]
  %s2 = scalar_lea.hbm %s0, 256
  $region1: #{custom-call.1} parent=0
    #allocation0 [shape = 's32[1]{0}', space=sflag, size = 0x4, scoped, tag = 'scoped memory for custom-call.1']
    %3 = vsyncpa [#allocation0], 0
    %s4 = sshll.u32 %s1, 4
    %s5 = int_to_ptr.vmem [resolvable:$true] %s4
    %7 = dma.hbm_to_vmem [thread:$0]  %s2, 256, %s5, [#allocation0]
    %8 = dma.done [#allocation0], 256
    %9 = vsyncpa [#allocation0], 1

// kernel: custom-call
$region0: #{custom-call}
  %s0 = inlined_call_operand.hbm [shape: c64[2,1,8,32], index: 0, kind: input, shape index: {}]
  %s1 = inlined_call_operand.vmem [shape: f32[2,1,8,32], index: 1, kind: output, shape index: {}]
  $region1: #{custom-call} parent=0
    #allocation0 [shape = 's32[1]{0}', space=sflag, size = 0x4, scoped, tag = 'scoped memory for custom-call']
    %2 = vsyncpa [#allocation0], 0
    %s3 = sshll.u32 %s1, 4
    %s4 = int_to_ptr.vmem [resolvable:$true] %s3
    %6 = dma.hbm_to_vmem [thread:$0]  %s0, 256, %s4, [#allocation0]
    %7 = dma.done [#allocation0], 256
    %8 = vsyncpa [#allocation0], 1

// kernel: custom-call.2
$region0: #{custom-call.2}
  %s0 = inlined_call_operand.hbm [shape: c64[2,1,8,64], index: 0, kind: input, shape index: {}]
  %s1 = inlined_call_operand.vmem [shape: f32[2,1,8,64], index: 1, kind: output, shape index: {}]
  $region1: #{custom-call.2} parent=0
    #allocation0 [shape = 's32[1]{0}', space=sflag, size = 0x4, scoped, tag = 'scoped memory for custom-call.2']
    %2 = vsyncpa [#allocation0], 0
    %s3 = sshll.u32 %s1, 4
    %s4 = int_to_ptr.vmem [resolvable:$true] %s3
    %6 = dma.hbm_to_vmem [thread:$0]  %s0, 256, %s4, [#allocation0]
    %7 = dma.done [#allocation0], 256
    %8 = vsyncpa [#allocation0], 1

// kernel: custom-call.3
$region0: #{custom-call.3}
  %s0 = inlined_call_operand.hbm [shape: c64[2,1,8,64], index: 0, kind: input, shape index: {}]
  %s1 = inlined_call_operand.vmem [shape: f32[2,1,8,64], index: 1, kind: output, shape index: {}]
  %s2 = scalar_lea.hbm %s0, 256
  $region1: #{custom-call.3} parent=0
    #allocation0 [shape = 's32[1]{0}', space=sflag, size = 0x4, scoped, tag = 'scoped memory for custom-call.3']
    %3 = vsyncpa [#allocation0], 0
    %s4 = sshll.u32 %s1, 4
    %s5 = int_to_ptr.vmem [resolvable:$true] %s4
    %7 = dma.hbm_to_vmem [thread:$0]  %s2, 256, %s5, [#allocation0]
    %8 = dma.done [#allocation0], 256
    %9 = vsyncpa [#allocation0], 1

// kernel: custom-call.6
$region0: #{custom-call.6}
  %s0 = inlined_call_operand.vmem [shape: f32[2,1,8,64], index: 0, kind: input, shape index: {}]
  %s1 = inlined_call_operand.vmem [shape: f32[2,1,8,64], index: 1, kind: input, shape index: {}]
  %s2 = inlined_call_operand.hbm [shape: c64[2,1,8,64], index: 2, kind: output, shape index: {}]
  %s3 = scalar_lea.hbm %s2, 256
  $region1: #{custom-call.6} parent=0
    #allocation0 [shape = 's32[1]{0}', space=sflag, size = 0x4, scoped, tag = 'scoped memory for custom-call.6']
    %4 = vsyncpa [#allocation0], 0
    %s5 = sshll.u32 %s0, 4
    %s6 = int_to_ptr.vmem [resolvable:$true] %s5
    %8 = dma.vmem_to_hbm [thread:$0]  %s6, 256, %s2, [#allocation0]
    %9 = dma.done [#allocation0], 256
    %10 = vsyncpa [#allocation0], 1
  $region2: #{custom-call.6} parent=0
    #allocation1 [shape = 's32[1]{0}', space=sflag, size = 0x4, scoped, tag = 'scoped memory for custom-call.6']
    %11 = vsyncpa [#allocation1], 0
    %s12 = sshll.u32 %s1, 4
    %s13 = int_to_ptr.vmem [resolvable:$true] %s12
    %15 = dma.vmem_to_hbm [thread:$0]  %s13, 256, %s3, [#allocation1]
    %16 = dma.done [#allocation1], 256
    %17 = vsyncpa [#allocation1], 1

// kernel: complex_bn_gru_cell.1
$region0: #{complex_bn_gru_cell.1}
  #allocation0 [shape = 'u32[]', space=smem, size = 0x4, offset = 0x4, fixed_abs, tag = 'smem constant byte address 0x4 - core index']
  #allocation1 [shape = 'u32[144,128]{1,0:T(1,128)}', space=vmem, size = 0x12000, scoped, tag = 'internal scratch']
  %s0 = inlined_call_operand.vmem [shape: bf16[16,64], index: 0, kind: input, shape index: {}]
  %s1 = inlined_call_operand.vmem [shape: bf16[16,128], index: 1, kind: input, shape index: {}]
  %s2 = inlined_call_operand.vmem [shape: bf16[64,384], index: 2, kind: input, shape index: {}]
  %s3 = inlined_call_operand.hbm [shape: bf16[128,384], index: 3, kind: input, shape index: {}]
  %s4 = inlined_call_operand.vmem [shape: f32[1,384], index: 4, kind: input, shape index: {}]
  %s5 = inlined_call_operand.vmem [shape: f32[1,384], index: 5, kind: input, shape index: {}]
  %s6 = inlined_call_operand.vmem [shape: f32[6], index: 6, kind: input, shape index: {}]
  %s7 = inlined_call_operand.vmem [shape: f32[16,384], index: 7, kind: output, shape index: {}]
  %s8 = sld [smem:[#allocation0]]
  $region46: #{complex_bn_gru_cell.1} parent=0
    _
  %s10 = ssub.s32 1, %s8
  %s11 = scalar_select 0, %s10, %s8
  $region1: #{complex_bn_gru_cell.1} parent=0
    #allocation2 [shape = 'u8[98304]{0}', space=vmem, size = 0x18000, scoped, tag = 'input window, operand 3, single buffered']
    #allocation3 [shape = 's32[1]{0}', space=sflag, size = 0x4, scoped, tag = 'scoped memory for complex_bn_gru_cell.1']
    #allocation4 [shape = 's32[1]{0}', space=sflag, size = 0x4, scoped, tag = 'scoped memory for complex_bn_gru_cell.1']
    #allocation5 [shape = 'u8[512]{0}', space=smem, size = 0x200, scoped, tag = 'input window, operand 6, single buffered']
    %12 = vsyncpa [#allocation3], 0
    %13 = vsyncpa [#allocation4], 0
    // Predicated region
    $region2: #{complex_bn_gru_cell.1} parent=1 // pred_check
      _
    $region3: #{complex_bn_gru_cell.1} parent=1 // pred_check_branch
      %15 = sbr.rel (0) target = $region5
    $region4: #{complex_bn_gru_cell.1} parent=1 // pred_region
      _
    $region5: #{complex_bn_gru_cell.1} parent=1 // pred_fallthru
      _
    // Predicated region
    $region6: #{complex_bn_gru_cell.1} parent=1 // pred_check
      _
    $region7: #{complex_bn_gru_cell.1} parent=1 // pred_check_branch
      %17 = sbr.rel (0) target = $region9
    $region8: #{complex_bn_gru_cell.1} parent=1 // pred_region
      _
    $region9: #{complex_bn_gru_cell.1} parent=1 // pred_fallthru
      _
    // Predicated region
    $region10: #{complex_bn_gru_cell.1} parent=1 // pred_check
      _
    $region11: #{complex_bn_gru_cell.1} parent=1 // pred_check_branch
      %19 = sbr.rel (0) target = $region13
    $region12: #{complex_bn_gru_cell.1} parent=1 // pred_region
      _
    $region13: #{complex_bn_gru_cell.1} parent=1 // pred_fallthru
      _
    // Predicated region
    $region14: #{complex_bn_gru_cell.1} parent=1 // pred_check
      _
    $region15: #{complex_bn_gru_cell.1} parent=1 // pred_check_branch
      %21 = sbr.rel (0) target = $region17
    $region16: #{complex_bn_gru_cell.1} parent=1 // pred_region
      %s23 = ssub.s32 3072, 3072
      %24 = vsyncadd [#allocation3], %s23
      %s25 = sshll.u32 [#allocation2], 4
      %s26 = int_to_ptr.vmem [resolvable:$true] %s25
      %31 = dma.hbm_to_vmem [thread:$0]  %s3, 3072, %s26, [#allocation3], 192, 192, 12
    $region17: #{complex_bn_gru_cell.1} parent=1 // pred_fallthru
      _
    // Predicated region
    $region18: #{complex_bn_gru_cell.1} parent=1 // pred_check
      _
    $region19: #{complex_bn_gru_cell.1} parent=1 // pred_check_branch
      %33 = sbr.rel (0) target = $region21
    $region20: #{complex_bn_gru_cell.1} parent=1 // pred_region
      _
    $region21: #{complex_bn_gru_cell.1} parent=1 // pred_fallthru
      _
    // Predicated region
    $region22: #{complex_bn_gru_cell.1} parent=1 // pred_check
      _
    $region23: #{complex_bn_gru_cell.1} parent=1 // pred_check_branch
      %35 = sbr.rel (0) target = $region25
    $region24: #{complex_bn_gru_cell.1} parent=1 // pred_region
      _
    $region25: #{complex_bn_gru_cell.1} parent=1 // pred_fallthru
      _
    // Predicated region
    $region26: #{complex_bn_gru_cell.1} parent=1 // pred_check
      _
    $region27: #{complex_bn_gru_cell.1} parent=1 // pred_check_branch
      %37 = sbr.rel (0) target = $region29
    $region28: #{complex_bn_gru_cell.1} parent=1 // pred_region
      %s39 = ssub.s32 16, 16
      %40 = vsyncadd [#allocation4], %s39
      %s42 = sshll.u32 %s6, 4
      %s43 = int_to_ptr.vmem [resolvable:$true] %s42
      %45 = dma.vmem_to_smem %s43, 16, [#allocation5], [#allocation4]
    $region29: #{complex_bn_gru_cell.1} parent=1 // pred_fallthru
      _
    // Predicated region
    $region30: #{complex_bn_gru_cell.1} parent=1 // pred_check
      _
    $region31: #{complex_bn_gru_cell.1} parent=1 // pred_check_branch
      %47 = sbr.rel (0) target = $region33
    $region32: #{complex_bn_gru_cell.1} parent=1 // pred_region
      %48 = dma.done [#allocation3], 3072
    $region33: #{complex_bn_gru_cell.1} parent=1 // pred_fallthru
      _
    // Predicated region
    $region34: #{complex_bn_gru_cell.1} parent=1 // pred_check
      _
    $region35: #{complex_bn_gru_cell.1} parent=1 // pred_check_branch
      %50 = sbr.rel (0) target = $region37
    $region36: #{complex_bn_gru_cell.1} parent=1 // pred_region
      %51 = dma.done [#allocation4], 16
    $region37: #{complex_bn_gru_cell.1} parent=1 // pred_fallthru
      _
    %52 = sfence
    %s54 = sld [smem:[#allocation5]]
    %s55 = sld [smem:[#allocation5 + $0x1]]
    %s56 = sld [smem:[#allocation5 + $0x2]]
    %s57 = sld [smem:[#allocation5 + $0x3]]
    %s58 = sld [smem:[#allocation5 + $0x4]]
    %s59 = sld [smem:[#allocation5 + $0x5]]
    %v60 = vlaneseq
    %v61 = vand.u32 %v60, 127
    %vm62 = vcmp.lt.s32.totalorder %v61, 64
    %v63 = vld [vmem:[%s0] sm:$0xf]
    %v64 = vld [vmem:[%s0 + $0x4] sm:$0xf]
    %v65 = vld [vmem:[%s2] sm:$0xff]
    %v66 = vld [vmem:[%s2 + $0x8] sm:$0xf]
    %v67 = vld [vmem:[%s2 + $0xc] sm:$0xff]
    %v68 = vld [vmem:[%s2 + $0x14] sm:$0xf]
    %v69 = vld [vmem:[%s2 + $0x18] sm:$0xff]
    %v70 = vld [vmem:[%s2 + $0x20] sm:$0xf]
    %v71 = vld [vmem:[%s2 + $0x24] sm:$0xff]
    %v72 = vld [vmem:[%s2 + $0x2c] sm:$0xf]
    %v73 = vld [vmem:[%s2 + $0x30] sm:$0xff]
    %v74 = vld [vmem:[%s2 + $0x38] sm:$0xf]
    %v75 = vld [vmem:[%s2 + $0x3c] sm:$0xff]
    %v76 = vld [vmem:[%s2 + $0x44] sm:$0xf]
    %v77 = vld [vmem:[%s2 + $0x48] sm:$0xff]
    %v78 = vld [vmem:[%s2 + $0x50] sm:$0xf]
    %v79 = vld [vmem:[%s2 + $0x54] sm:$0xff]
    %v80 = vld [vmem:[%s2 + $0x5c] sm:$0xf]
    %v81 = vld [vmem:[%s4] sm:$0x7]
    %v83 = vlaneseq
    %v84 = vshrl.u32 %v83, 7
    %v85 = vsub.s32 0, %v84
    %v86 = vrot.slane %v81, %v85
    %v87 = vlaneseq
    %v88 = vshrl.u32 %v87, 7
    %v89 = vsub.s32 1, %v88
    %v90 = vrot.slane %v81, %v89
    %v91 = vlaneseq
    %v92 = vshrl.u32 %v91, 7
    %v93 = vsub.s32 2, %v92
    %v94 = vrot.slane %v81, %v93
    %v100 = vunpack.c.l.b16 %v63
    %v101 = vunpack.c.l.b16 %v64
    %v102 = vpack.c.b16 %v101, %v100
    %v119 = vunpack.c.l.b16 %v65
    %v120 = vunpack.c.h.b16 %v65
    %v121 = vunpack.c.l.b16 %v66
    %v122 = vunpack.c.l.b16 %v67
    %v123 = vunpack.c.h.b16 %v67
    %v124 = vunpack.c.l.b16 %v68
    %v125 = vunpack.c.l.b16 %v69
    %v126 = vunpack.c.h.b16 %v69
    %v127 = vunpack.c.l.b16 %v70
    %v128 = vunpack.c.l.b16 %v71
    %v129 = vunpack.c.h.b16 %v71
    %v130 = vunpack.c.l.b16 %v72
    %v131 = vunpack.c.l.b16 %v73
    %v132 = vunpack.c.h.b16 %v73
    %v133 = vunpack.c.l.b16 %v74
    %v134 = vunpack.c.l.b16 %v75
    %v135 = vunpack.c.h.b16 %v75
    %v136 = vunpack.c.l.b16 %v76
    %v137 = vunpack.c.l.b16 %v77
    %v138 = vunpack.c.h.b16 %v77
    %v139 = vunpack.c.l.b16 %v78
    %v140 = vunpack.c.l.b16 %v79
    %v141 = vunpack.c.h.b16 %v79
    %v142 = vunpack.c.l.b16 %v80
    %v143 = vpack.c.b16 %v122, %v119
    %v144 = vpack.c.b16 %v123, %v120
    %v145 = vpack.c.b16 %v124, %v121
    %v146 = vpack.c.b16 %v128, %v125
    %v147 = vpack.c.b16 %v129, %v126
    %v148 = vpack.c.b16 %v130, %v127
    %v149 = vpack.c.b16 %v134, %v131
    %v150 = vpack.c.b16 %v135, %v132
    %v151 = vpack.c.b16 %v136, %v133
    %v152 = vpack.c.b16 %v140, %v137
    %v153 = vpack.c.b16 %v141, %v138
    %v154 = vpack.c.b16 %v142, %v139
    %vm167 = vcmask 523264
    %v169 = vsel %vm167, %v102, 0
    %171 = vmatprep.subr.bf16.mxu0 %v144
    %172 = vmatpush1.bf16.msra.mxu0 %v143
    %173 = vmatprep.subr.bf16.mxu0 %v147
    %174 = vmatpush1.bf16.msra.mxu0 %v146
    %175 = vmatprep.subr.bf16.mxu0 %v150
    %176 = vmatpush1.bf16.msra.mxu0 %v149
    %177 = vmatprep.subr.bf16.mxu0 %v153
    %178 = vmatpush1.bf16.msra.mxu0 %v152
    %179 = vmatprep.subr.bf16.mxu0 0
    %180 = vmatpush1.bf16.msra.mxu0 0
    %181 = vmatprep.subr.bf16.mxu0 0
    %182 = vmatpush1.bf16.msra.mxu0 0
    %183 = vmatprep.subr.bf16.mxu0 0
    %184 = vmatpush1.bf16.msra.mxu0 0
    %185 = vmatprep.subr.bf16.mxu0 0
    %186 = vmatpush1.bf16.msra.mxu0 0
    %187 = vmatprep.subr.bf16.mxu0 0
    %188 = vmatpush1.bf16.msra.mxu0 0
    %189 = vmatprep.subr.bf16.mxu0 0
    %190 = vmatpush1.bf16.msra.mxu0 0
    %191 = vmatprep.subr.bf16.mxu0 0
    %192 = vmatpush1.bf16.msra.mxu0 0
    %193 = vmatprep.subr.bf16.mxu0 0
    %194 = vmatpush1.bf16.msra.mxu0 0
    %195 = vmatprep.subr.bf16.mxu0 0
    %196 = vmatpush1.bf16.msra.mxu0 0
    %197 = vmatprep.subr.bf16.mxu0 0
    %198 = vmatpush1.bf16.msra.mxu0 0
    %199 = vmatprep.subr.bf16.mxu0 0
    %200 = vmatpush1.bf16.msra.mxu0 0
    %201 = vmatprep.subr.bf16.mxu0 0
    %202 = vmatpush1.bf16.msra.mxu0 0
    %203 = vmatprep.mubr.bf16.mxu0 0
    %204 = vmatmul.mubr.bf16.gmra.mrb[0].mxu0 %v169
    %v205 = vpop.f32.mrb[0].mxu0
    %v206 = vadd.f32 %v86, %v205
    %v207 = vpop.f32.mrb[0].mxu0
    %v208 = vadd.f32 %v90, %v207
    %v209 = vpop.f32.mrb[0].mxu0
    %v210 = vadd.f32 %v86, %v209
    %v211 = vpop.f32.mrb[0].mxu0
    %v212 = vadd.f32 %v90, %v211
    %213 = vdwg.mxu0
    %214 = vmatprep.subr.bf16.mxu0 0
    %215 = vmatpush1.bf16.msra.mxu0 %v145
    %216 = vmatprep.subr.bf16.mxu0 0
    %217 = vmatpush1.bf16.msra.mxu0 %v148
    %218 = vmatprep.subr.bf16.mxu0 0
    %219 = vmatpush1.bf16.msra.mxu0 %v151
    %220 = vmatprep.subr.bf16.mxu0 0
    %221 = vmatpush1.bf16.msra.mxu0 %v154
    %222 = vmatprep.subr.bf16.mxu0 0
    %223 = vmatpush1.bf16.msra.mxu0 0
    %224 = vmatprep.subr.bf16.mxu0 0
    %225 = vmatpush1.bf16.msra.mxu0 0
    %226 = vmatprep.subr.bf16.mxu0 0
    %227 = vmatpush1.bf16.msra.mxu0 0
    %228 = vmatprep.subr.bf16.mxu0 0
    %229 = vmatpush1.bf16.msra.mxu0 0
    %230 = vmatprep.subr.bf16.mxu0 0
    %231 = vmatpush1.bf16.msra.mxu0 0
    %232 = vmatprep.subr.bf16.mxu0 0
    %233 = vmatpush1.bf16.msra.mxu0 0
    %234 = vmatprep.subr.bf16.mxu0 0
    %235 = vmatpush1.bf16.msra.mxu0 0
    %236 = vmatprep.subr.bf16.mxu0 0
    %237 = vmatpush1.bf16.msra.mxu0 0
    %238 = vmatprep.subr.bf16.mxu0 0
    %239 = vmatpush1.bf16.msra.mxu0 0
    %240 = vmatprep.subr.bf16.mxu0 0
    %241 = vmatpush1.bf16.msra.mxu0 0
    %242 = vmatprep.subr.bf16.mxu0 0
    %243 = vmatpush1.bf16.msra.mxu0 0
    %244 = vmatprep.subr.bf16.mxu0 0
    %245 = vmatpush1.bf16.msra.mxu0 0
    %246 = vmatprep.mubr.bf16.mxu0 0
    %247 = vmatmul.mubr.bf16.gmra.mrb[0].mxu0 %v169
    %v248 = vpop.f32.mrb[0].mxu0
    %v249 = vadd.f32 %v94, %v248
    %v250 = vpop.f32.mrb[0].mxu0
    %v251 = vpop.f32.mrb[0].mxu0
    %v252 = vadd.f32 %v94, %v251
    %v253 = vpop.f32.mrb[0].mxu0
    %254 = vdwg.mxu0
    %v255 = vld [vmem:[%s1] sm:$0xf]
    %v256 = vld [vmem:[%s1 + $0x4] sm:$0xf]
    %v257 = vld [vmem:[#allocation2] sm:$0xff]
    %v258 = vld [vmem:[#allocation2 + $0x8] sm:$0xf]
    %v259 = vld [vmem:[#allocation2 + $0xc] sm:$0xff]
    %v260 = vld [vmem:[#allocation2 + $0x14] sm:$0xf]
    %v261 = vld [vmem:[#allocation2 + $0x18] sm:$0xff]
    %v262 = vld [vmem:[#allocation2 + $0x20] sm:$0xf]
    %v263 = vld [vmem:[#allocation2 + $0x24] sm:$0xff]
    %v264 = vld [vmem:[#allocation2 + $0x2c] sm:$0xf]
    %v265 = vld [vmem:[#allocation2 + $0x30] sm:$0xff]
    %v266 = vld [vmem:[#allocation2 + $0x38] sm:$0xf]
    %v267 = vld [vmem:[#allocation2 + $0x3c] sm:$0xff]
    %v268 = vld [vmem:[#allocation2 + $0x44] sm:$0xf]
    %v269 = vld [vmem:[#allocation2 + $0x48] sm:$0xff]
    %v270 = vld [vmem:[#allocation2 + $0x50] sm:$0xf]
    %v271 = vld [vmem:[#allocation2 + $0x54] sm:$0xff]
    %v272 = vld [vmem:[#allocation2 + $0x5c] sm:$0xf]
    %v273 = vld [vmem:[#allocation2 + $0x60] sm:$0xff]
    %v274 = vld [vmem:[#allocation2 + $0x68] sm:$0xf]
    %v275 = vld [vmem:[#allocation2 + $0x6c] sm:$0xff]
    %v276 = vld [vmem:[#allocation2 + $0x74] sm:$0xf]
    %v277 = vld [vmem:[#allocation2 + $0x78] sm:$0xff]
    %v278 = vld [vmem:[#allocation2 + $0x80] sm:$0xf]
    %v279 = vld [vmem:[#allocation2 + $0x84] sm:$0xff]
    %v280 = vld [vmem:[#allocation2 + $0x8c] sm:$0xf]
    %v281 = vld [vmem:[#allocation2 + $0x90] sm:$0xff]
    %v282 = vld [vmem:[#allocation2 + $0x98] sm:$0xf]
    %v283 = vld [vmem:[#allocation2 + $0x9c] sm:$0xff]
    %v284 = vld [vmem:[#allocation2 + $0xa4] sm:$0xf]
    %v285 = vld [vmem:[#allocation2 + $0xa8] sm:$0xff]
    %v286 = vld [vmem:[#allocation2 + $0xb0] sm:$0xf]
    %v287 = vld [vmem:[#allocation2 + $0xb4] sm:$0xff]
    %v288 = vld [vmem:[#allocation2 + $0xbc] sm:$0xf]
    %v289 = vld [vmem:[%s5] sm:$0x7]
    %v291 = vlaneseq
    %v292 = vshrl.u32 %v291, 7
    %v293 = vsub.s32 0, %v292
    %v294 = vrot.slane %v289, %v293
    %v295 = vlaneseq
    %v296 = vshrl.u32 %v295, 7
    %v297 = vsub.s32 1, %v296
    %v298 = vrot.slane %v289, %v297
    %v299 = vlaneseq
    %v300 = vshrl.u32 %v299, 7
    %v301 = vsub.s32 2, %v300
    %v302 = vrot.slane %v289, %v301
    %v308 = vunpack.c.l.b16 %v255
    %v309 = vunpack.c.l.b16 %v256
    %v310 = vpack.c.b16 %v309, %v308
    %v344 = vunpack.c.l.b16 %v257
    %v345 = vunpack.c.h.b16 %v257
    %v346 = vunpack.c.l.b16 %v258
    %v347 = vunpack.c.l.b16 %v259
    %v348 = vunpack.c.h.b16 %v259
    %v349 = vunpack.c.l.b16 %v260
    %v350 = vunpack.c.l.b16 %v261
    %v351 = vunpack.c.h.b16 %v261
    %v352 = vunpack.c.l.b16 %v262
    %v353 = vunpack.c.l.b16 %v263
    %v354 = vunpack.c.h.b16 %v263
    %v355 = vunpack.c.l.b16 %v264
    %v356 = vunpack.c.l.b16 %v265
    %v357 = vunpack.c.h.b16 %v265
    %v358 = vunpack.c.l.b16 %v266
    %v359 = vunpack.c.l.b16 %v267
    %v360 = vunpack.c.h.b16 %v267
    %v361 = vunpack.c.l.b16 %v268
    %v362 = vunpack.c.l.b16 %v269
    %v363 = vunpack.c.h.b16 %v269
    %v364 = vunpack.c.l.b16 %v270
    %v365 = vunpack.c.l.b16 %v271
    %v366 = vunpack.c.h.b16 %v271
    %v367 = vunpack.c.l.b16 %v272
    %v368 = vunpack.c.l.b16 %v273
    %v369 = vunpack.c.h.b16 %v273
    %v370 = vunpack.c.l.b16 %v274
    %v371 = vunpack.c.l.b16 %v275
    %v372 = vunpack.c.h.b16 %v275
    %v373 = vunpack.c.l.b16 %v276
    %v374 = vunpack.c.l.b16 %v277
    %v375 = vunpack.c.h.b16 %v277
    %v376 = vunpack.c.l.b16 %v278
    %v377 = vunpack.c.l.b16 %v279
    %v378 = vunpack.c.h.b16 %v279
    %v379 = vunpack.c.l.b16 %v280
    %v380 = vunpack.c.l.b16 %v281
    %v381 = vunpack.c.h.b16 %v281
    %v382 = vunpack.c.l.b16 %v282
    %v383 = vunpack.c.l.b16 %v283
    %v384 = vunpack.c.h.b16 %v283
    %v385 = vunpack.c.l.b16 %v284
    %v386 = vunpack.c.l.b16 %v285
    %v387 = vunpack.c.h.b16 %v285
    %v388 = vunpack.c.l.b16 %v286
    %v389 = vunpack.c.l.b16 %v287
    %v390 = vunpack.c.h.b16 %v287
    %v391 = vunpack.c.l.b16 %v288
    %v392 = vpack.c.b16 %v347, %v344
    %v393 = vpack.c.b16 %v348, %v345
    %v394 = vpack.c.b16 %v349, %v346
    %v395 = vpack.c.b16 %v353, %v350
    %v396 = vpack.c.b16 %v354, %v351
    %v397 = vpack.c.b16 %v355, %v352
    %v398 = vpack.c.b16 %v359, %v356
    %v399 = vpack.c.b16 %v360, %v357
    %v400 = vpack.c.b16 %v361, %v358
    %v401 = vpack.c.b16 %v365, %v362
    %v402 = vpack.c.b16 %v366, %v363
    %v403 = vpack.c.b16 %v367, %v364
    %v404 = vpack.c.b16 %v371, %v368
    %v405 = vpack.c.b16 %v372, %v369
    %v406 = vpack.c.b16 %v373, %v370
    %v407 = vpack.c.b16 %v377, %v374
    %v408 = vpack.c.b16 %v378, %v375
    %v409 = vpack.c.b16 %v379, %v376
    %v410 = vpack.c.b16 %v383, %v380
    %v411 = vpack.c.b16 %v384, %v381
    %v412 = vpack.c.b16 %v385, %v382
    %v413 = vpack.c.b16 %v389, %v386
    %v414 = vpack.c.b16 %v390, %v387
    %v415 = vpack.c.b16 %v391, %v388
    %440 = vmatprep.subr.bf16.mxu0 %v393
    %441 = vmatpush1.bf16.msra.mxu0 %v392
    %442 = vmatprep.subr.bf16.mxu0 %v396
    %443 = vmatpush1.bf16.msra.mxu0 %v395
    %444 = vmatprep.subr.bf16.mxu0 %v399
    %445 = vmatpush1.bf16.msra.mxu0 %v398
    %446 = vmatprep.subr.bf16.mxu0 %v402
    %447 = vmatpush1.bf16.msra.mxu0 %v401
    %448 = vmatprep.subr.bf16.mxu0 %v405
    %449 = vmatpush1.bf16.msra.mxu0 %v404
    %450 = vmatprep.subr.bf16.mxu0 %v408
    %451 = vmatpush1.bf16.msra.mxu0 %v407
    %452 = vmatprep.subr.bf16.mxu0 %v411
    %453 = vmatpush1.bf16.msra.mxu0 %v410
    %454 = vmatprep.subr.bf16.mxu0 %v414
    %455 = vmatpush1.bf16.msra.mxu0 %v413
    %456 = vmatprep.subr.bf16.mxu0 0
    %457 = vmatpush1.bf16.msra.mxu0 0
    %458 = vmatprep.subr.bf16.mxu0 0
    %459 = vmatpush1.bf16.msra.mxu0 0
    %460 = vmatprep.subr.bf16.mxu0 0
    %461 = vmatpush1.bf16.msra.mxu0 0
    %462 = vmatprep.subr.bf16.mxu0 0
    %463 = vmatpush1.bf16.msra.mxu0 0
    %464 = vmatprep.subr.bf16.mxu0 0
    %465 = vmatpush1.bf16.msra.mxu0 0
    %466 = vmatprep.subr.bf16.mxu0 0
    %467 = vmatpush1.bf16.msra.mxu0 0
    %468 = vmatprep.subr.bf16.mxu0 0
    %469 = vmatpush1.bf16.msra.mxu0 0
    %470 = vmatprep.subr.bf16.mxu0 0
    %471 = vmatpush1.bf16.msra.mxu0 0
    %472 = vmatprep.mubr.bf16.mxu0 0
    %473 = vmatmul.mubr.bf16.gmra.mrb[0].mxu0 %v310
    %v474 = vpop.f32.mrb[0].mxu0
    %v475 = vadd.f32 %v294, %v474
    %v476 = vpop.f32.mrb[0].mxu0
    %v477 = vadd.f32 %v298, %v476
    %v478 = vpop.f32.mrb[0].mxu0
    %v479 = vadd.f32 %v294, %v478
    %v480 = vpop.f32.mrb[0].mxu0
    %v481 = vadd.f32 %v298, %v480
    %482 = vdwg.mxu0
    %483 = vmatprep.subr.bf16.mxu0 0
    %484 = vmatpush1.bf16.msra.mxu0 %v394
    %485 = vmatprep.subr.bf16.mxu0 0
    %486 = vmatpush1.bf16.msra.mxu0 %v397
    %487 = vmatprep.subr.bf16.mxu0 0
    %488 = vmatpush1.bf16.msra.mxu0 %v400
    %489 = vmatprep.subr.bf16.mxu0 0
    %490 = vmatpush1.bf16.msra.mxu0 %v403
    %491 = vmatprep.subr.bf16.mxu0 0
    %492 = vmatpush1.bf16.msra.mxu0 %v406
    %493 = vmatprep.subr.bf16.mxu0 0
    %494 = vmatpush1.bf16.msra.mxu0 %v409
    %495 = vmatprep.subr.bf16.mxu0 0
    %496 = vmatpush1.bf16.msra.mxu0 %v412
    %497 = vmatprep.subr.bf16.mxu0 0
    %498 = vmatpush1.bf16.msra.mxu0 %v415
    %499 = vmatprep.subr.bf16.mxu0 0
    %500 = vmatpush1.bf16.msra.mxu0 0
    %501 = vmatprep.subr.bf16.mxu0 0
    %502 = vmatpush1.bf16.msra.mxu0 0
    %503 = vmatprep.subr.bf16.mxu0 0
    %504 = vmatpush1.bf16.msra.mxu0 0
    %505 = vmatprep.subr.bf16.mxu0 0
    %506 = vmatpush1.bf16.msra.mxu0 0
    %507 = vmatprep.subr.bf16.mxu0 0
    %508 = vmatpush1.bf16.msra.mxu0 0
    %509 = vmatprep.subr.bf16.mxu0 0
    %510 = vmatpush1.bf16.msra.mxu0 0
    %511 = vmatprep.subr.bf16.mxu0 0
    %512 = vmatpush1.bf16.msra.mxu0 0
    %513 = vmatprep.subr.bf16.mxu0 0
    %514 = vmatpush1.bf16.msra.mxu0 0
    %515 = vmatprep.mubr.bf16.mxu0 0
    %516 = vmatmul.mubr.bf16.gmra.mrb[0].mxu0 %v310
    %v517 = vpop.f32.mrb[0].mxu0
    %v518 = vadd.f32 %v302, %v517
    %v519 = vpop.f32.mrb[0].mxu0
    %v520 = vpop.f32.mrb[0].mxu0
    %v521 = vadd.f32 %v302, %v520
    %v522 = vpop.f32.mrb[0].mxu0
    %523 = vdwg.mxu0
    %524 = vrot.lane.b32.xlu0 %v206, 64
    %v525 = vpop.permute.xlu0 %524
    %526 = vrot.lane.b32.xlu0 %v210, 64
    %v527 = vpop.permute.xlu0 %526
    %v528 = vadd.f32 %v206, %v210
    %v529 = vrot.slane %v528, 4
    %v530 = vadd.f32 %v528, %v529
    %v531 = vrot.slane %v530, 2
    %v532 = vadd.f32 %v530, %v531
    %v533 = vrot.slane %v532, 1
    %v534 = vadd.f32 %v532, %v533
    %v535 = vmul.f32 %v206, %v206
    %v536 = vmul.f32 %v210, %v210
    %v537 = vadd.f32 %v535, %v536
    %v538 = vrot.slane %v537, 4
    %v539 = vadd.f32 %v537, %v538
    %v540 = vrot.slane %v539, 2
    %v541 = vadd.f32 %v539, %v540
    %v542 = vrot.slane %v541, 1
    %v543 = vadd.f32 %v541, %v542
    %v544 = vmul.f32 %v206, %v525
    %v545 = vmul.f32 %v210, %v527
    %v546 = vadd.f32 %v544, %v545
    %v547 = vrot.slane %v546, 4
    %v548 = vadd.f32 %v546, %v547
    %v549 = vrot.slane %v548, 2
    %v550 = vadd.f32 %v548, %v549
    %v551 = vrot.slane %v550, 1
    %v552 = vadd.f32 %v550, %v551
    %v553 = vsel %vm62, %v534, 0.0
    %vm554 = vcmask 1040384
    %v555 = vsel %vm554, %v553, 0.0
    %556 = vadd.xlane.f32.xlu0 %v555
    %v557 = vpop.xlane.xlu0 %556
    %v558 = vrot.slane %v557, 4
    %v559 = vadd.f32 %v557, %v558
    %v560 = vrot.slane %v559, 2
    %v561 = vadd.f32 %v559, %v560
    %v562 = vrot.slane %v561, 1
    %v563 = vadd.f32 %v561, %v562
    %s564 = vtos %v563
    %v565 = vsel %vm554, %v534, 0.0
    %566 = vadd.xlane.f32.xlu0 %v565
    %v567 = vpop.xlane.xlu0 %566
    %v568 = vrot.slane %v567, 4
    %v569 = vadd.f32 %v567, %v568
    %v570 = vrot.slane %v569, 2
    %v571 = vadd.f32 %v569, %v570
    %v572 = vrot.slane %v571, 1
    %v573 = vadd.f32 %v571, %v572
    %s574 = vtos %v573
    %s575 = ssub.f32 %s574, %s564
    %v576 = vsel %vm62, %v543, 0.0
    %v577 = vsel %vm554, %v576, 0.0
    %578 = vadd.xlane.f32.xlu0 %v577
    %v579 = vpop.xlane.xlu0 %578
    %v580 = vrot.slane %v579, 4
    %v581 = vadd.f32 %v579, %v580
    %v582 = vrot.slane %v581, 2
    %v583 = vadd.f32 %v581, %v582
    %v584 = vrot.slane %v583, 1
    %v585 = vadd.f32 %v583, %v584
    %s586 = vtos %v585
    %v587 = vsel %vm554, %v543, 0.0
    %588 = vadd.xlane.f32.xlu0 %v587
    %v589 = vpop.xlane.xlu0 %588
    %v590 = vrot.slane %v589, 4
    %v591 = vadd.f32 %v589, %v590
    %v592 = vrot.slane %v591, 2
    %v593 = vadd.f32 %v591, %v592
    %v594 = vrot.slane %v593, 1
    %v595 = vadd.f32 %v593, %v594
    %s596 = vtos %v595
    %s597 = ssub.f32 %s596, %s586
    %v598 = vsel %vm554, %v552, 0.0
    %599 = vadd.xlane.f32.xlu0 %v598
    %v600 = vpop.xlane.xlu0 %599
    %v601 = vrot.slane %v600, 4
    %v602 = vadd.f32 %v600, %v601
    %v603 = vrot.slane %v602, 2
    %v604 = vadd.f32 %v602, %v603
    %v605 = vrot.slane %v604, 1
    %v606 = vadd.f32 %v604, %v605
    %s607 = vtos %v606
    %s608 = smul.f32 %s607, 0.5
    %s609 = smul.f32 %s564, 0.0009765625
    %s610 = smul.f32 %s575, 0.0009765625
    %s611 = smul.f32 %s586, 0.0009765625
    %s612 = smul.f32 %s609, %s609
    %s613 = ssub.f32 %s611, %s612
    %s614 = sadd.f32 %s613, %s54
    %s615 = smul.f32 %s597, 0.0009765625
    %s616 = smul.f32 %s610, %s610
    %s617 = ssub.f32 %s615, %s616
    %s618 = sadd.f32 %s617, %s54
    %s619 = smul.f32 %s608, 0.0009765625
    %s620 = smul.f32 %s609, %s610
    %s621 = ssub.f32 %s619, %s620
    %s622 = smul.f32 %s614, %s618
    %s623 = smul.f32 %s621, %s621
    %s624 = ssub.f32 %s622, %s623
    %v625 = vstv %s624
    %v626 = vrsqrt.pop %v625
    %v627 = vmul.f32 %v625, %v626
    %vm628 = vcmp.eq.f32.partialorder %v625, inf
    %v629 = vsel %vm628, %v625, %v627
    %vm630 = vcmp.eq.f32.partialorder %v625, 0.0
    %v631 = vand.u32 %v625, 2147483648
    %v632 = vsel %vm630, %v631, %v629
    %s633 = vtos %v632
    %s634 = sadd.f32 %s614, %s618
    %s635 = smul.f32 %s633, 2.0
    %s636 = sadd.f32 %s634, %s635
    %v637 = vstv %s636
    %v638 = vrsqrt.pop %v637
    %v639 = vmul.f32 %v637, %v638
    %vm640 = vcmp.eq.f32.partialorder %v637, inf
    %v641 = vsel %vm640, %v637, %v639
    %vm642 = vcmp.eq.f32.partialorder %v637, 0.0
    %v643 = vand.u32 %v637, 2147483648
    %v644 = vsel %vm642, %v643, %v641
    %s645 = vtos %v644
    %s646 = smul.f32 %s633, %s645
    %v647 = vstv %s646
    %v648 = vrcp.pop %v647
    %s649 = vtos %v648
    %s650 = sadd.f32 %s618, %s633
    %s651 = smul.f32 %s650, %s649
    %s652 = sadd.f32 %s614, %s633
    %s653 = smul.f32 %s652, %s649
    %s654 = ssub.f32 0.0, %s621
    %s655 = smul.f32 %s654, %s649
    %s656 = smul.f32 %s55, %s651
    %s657 = smul.f32 %s57, %s655
    %s658 = sadd.f32 %s656, %s657
    %s659 = smul.f32 %s55, %s655
    %s660 = smul.f32 %s57, %s653
    %s661 = sadd.f32 %s659, %s660
    %s662 = smul.f32 %s56, %s653
    %s663 = sadd.f32 %s657, %s662
    %s664 = smul.f32 %s57, %s651
    %s665 = smul.f32 %s56, %s655
    %s666 = sadd.f32 %s664, %s665
    %v667 = vstv %s609
    %v668 = vstv %s610
    %v669 = vsel %vm62, %v667, %v668
    %v670 = vsel %vm62, %v668, %v667
    %v671 = vstv %s658
    %v672 = vstv %s663
    %v673 = vsel %vm62, %v671, %v672
    %v674 = vstv %s661
    %v675 = vstv %s666
    %v676 = vsel %vm62, %v674, %v675
    %v677 = vstv %s58
    %v678 = vstv %s59
    %v679 = vsel %vm62, %v677, %v678
    %v680 = vsub.f32 %v206, %v669
    %v681 = vsub.f32 %v210, %v669
    %v682 = vmul.f32 %v673, %v680
    %v683 = vmul.f32 %v673, %v681
    %v684 = vsub.f32 %v525, %v670
    %v685 = vsub.f32 %v527, %v670
    %v686 = vmul.f32 %v676, %v684
    %v687 = vmul.f32 %v676, %v685
    %v688 = vadd.f32 %v682, %v686
    %v689 = vadd.f32 %v683, %v687
    %v690 = vadd.f32 %v688, %v679
    %v691 = vadd.f32 %v689, %v679
    %692 = vrot.lane.b32.xlu0 %v475, 64
    %v693 = vpop.permute.xlu0 %692
    %694 = vrot.lane.b32.xlu0 %v479, 64
    %v695 = vpop.permute.xlu0 %694
    %v696 = vadd.f32 %v475, %v479
    %v697 = vrot.slane %v696, 4
    %v698 = vadd.f32 %v696, %v697
    %v699 = vrot.slane %v698, 2
    %v700 = vadd.f32 %v698, %v699
    %v701 = vrot.slane %v700, 1
    %v702 = vadd.f32 %v700, %v701
    %v703 = vmul.f32 %v475, %v475
    %v704 = vmul.f32 %v479, %v479
    %v705 = vadd.f32 %v703, %v704
    %v706 = vrot.slane %v705, 4
    %v707 = vadd.f32 %v705, %v706
    %v708 = vrot.slane %v707, 2
    %v709 = vadd.f32 %v707, %v708
    %v710 = vrot.slane %v709, 1
    %v711 = vadd.f32 %v709, %v710
    %v712 = vmul.f32 %v475, %v693
    %v713 = vmul.f32 %v479, %v695
    %v714 = vadd.f32 %v712, %v713
    %v715 = vrot.slane %v714, 4
    %v716 = vadd.f32 %v714, %v715
    %v717 = vrot.slane %v716, 2
    %v718 = vadd.f32 %v716, %v717
    %v719 = vrot.slane %v718, 1
    %v720 = vadd.f32 %v718, %v719
    %v721 = vsel %vm62, %v702, 0.0
    %v722 = vsel %vm554, %v721, 0.0
    %723 = vadd.xlane.f32.xlu0 %v722
    %v724 = vpop.xlane.xlu0 %723
    %v725 = vrot.slane %v724, 4
    %v726 = vadd.f32 %v724, %v725
    %v727 = vrot.slane %v726, 2
    %v728 = vadd.f32 %v726, %v727
    %v729 = vrot.slane %v728, 1
    %v730 = vadd.f32 %v728, %v729
    %s731 = vtos %v730
    %v732 = vsel %vm554, %v702, 0.0
    %733 = vadd.xlane.f32.xlu0 %v732
    %v734 = vpop.xlane.xlu0 %733
    %v735 = vrot.slane %v734, 4
    %v736 = vadd.f32 %v734, %v735
    %v737 = vrot.slane %v736, 2
    %v738 = vadd.f32 %v736, %v737
    %v739 = vrot.slane %v738, 1
    %v740 = vadd.f32 %v738, %v739
    %s741 = vtos %v740
    %s742 = ssub.f32 %s741, %s731
    %v743 = vsel %vm62, %v711, 0.0
    %v744 = vsel %vm554, %v743, 0.0
    %745 = vadd.xlane.f32.xlu0 %v744
    %v746 = vpop.xlane.xlu0 %745
    %v747 = vrot.slane %v746, 4
    %v748 = vadd.f32 %v746, %v747
    %v749 = vrot.slane %v748, 2
    %v750 = vadd.f32 %v748, %v749
    %v751 = vrot.slane %v750, 1
    %v752 = vadd.f32 %v750, %v751
    %s753 = vtos %v752
    %v754 = vsel %vm554, %v711, 0.0
    %755 = vadd.xlane.f32.xlu0 %v754
    %v756 = vpop.xlane.xlu0 %755
    %v757 = vrot.slane %v756, 4
    %v758 = vadd.f32 %v756, %v757
    %v759 = vrot.slane %v758, 2
    %v760 = vadd.f32 %v758, %v759
    %v761 = vrot.slane %v760, 1
    %v762 = vadd.f32 %v760, %v761
    %s763 = vtos %v762
    %s764 = ssub.f32 %s763, %s753
    %v765 = vsel %vm554, %v720, 0.0
    %766 = vadd.xlane.f32.xlu0 %v765
    %v767 = vpop.xlane.xlu0 %766
    %v768 = vrot.slane %v767, 4
    %v769 = vadd.f32 %v767, %v768
    %v770 = vrot.slane %v769, 2
    %v771 = vadd.f32 %v769, %v770
    %v772 = vrot.slane %v771, 1
    %v773 = vadd.f32 %v771, %v772
    %s774 = vtos %v773
    %s775 = smul.f32 %s774, 0.5
    %s776 = smul.f32 %s731, 0.0009765625
    %s777 = smul.f32 %s742, 0.0009765625
    %s778 = smul.f32 %s753, 0.0009765625
    %s779 = smul.f32 %s776, %s776
    %s780 = ssub.f32 %s778, %s779
    %s781 = sadd.f32 %s780, %s54
    %s782 = smul.f32 %s764, 0.0009765625
    %s783 = smul.f32 %s777, %s777
    %s784 = ssub.f32 %s782, %s783
    %s785 = sadd.f32 %s784, %s54
    %s786 = smul.f32 %s775, 0.0009765625
    %s787 = smul.f32 %s776, %s777
    %s788 = ssub.f32 %s786, %s787
    %s789 = smul.f32 %s781, %s785
    %s790 = smul.f32 %s788, %s788
    %s791 = ssub.f32 %s789, %s790
    %v792 = vstv %s791
    %v793 = vrsqrt.pop %v792
    %v794 = vmul.f32 %v792, %v793
    %vm795 = vcmp.eq.f32.partialorder %v792, inf
    %v796 = vsel %vm795, %v792, %v794
    %vm797 = vcmp.eq.f32.partialorder %v792, 0.0
    %v798 = vand.u32 %v792, 2147483648
    %v799 = vsel %vm797, %v798, %v796
    %s800 = vtos %v799
    %s801 = sadd.f32 %s781, %s785
    %s802 = smul.f32 %s800, 2.0
    %s803 = sadd.f32 %s801, %s802
    %v804 = vstv %s803
    %v805 = vrsqrt.pop %v804
    %v806 = vmul.f32 %v804, %v805
    %vm807 = vcmp.eq.f32.partialorder %v804, inf
    %v808 = vsel %vm807, %v804, %v806
    %vm809 = vcmp.eq.f32.partialorder %v804, 0.0
    %v810 = vand.u32 %v804, 2147483648
    %v811 = vsel %vm809, %v810, %v808
    %s812 = vtos %v811
    %s813 = smul.f32 %s800, %s812
    %v814 = vstv %s813
    %v815 = vrcp.pop %v814
    %s816 = vtos %v815
    %s817 = sadd.f32 %s785, %s800
    %s818 = smul.f32 %s817, %s816
    %s819 = sadd.f32 %s781, %s800
    %s820 = smul.f32 %s819, %s816
    %s821 = ssub.f32 0.0, %s788
    %s822 = smul.f32 %s821, %s816
    %s823 = smul.f32 %s55, %s818
    %s824 = smul.f32 %s57, %s822
    %s825 = sadd.f32 %s823, %s824
    %s826 = smul.f32 %s55, %s822
    %s827 = smul.f32 %s57, %s820
    %s828 = sadd.f32 %s826, %s827
    %s829 = smul.f32 %s56, %s820
    %s830 = sadd.f32 %s824, %s829
    %s831 = smul.f32 %s57, %s818
    %s832 = smul.f32 %s56, %s822
    %s833 = sadd.f32 %s831, %s832
    %v834 = vstv %s776
    %v835 = vstv %s777
    %v836 = vsel %vm62, %v834, %v835
    %v837 = vsel %vm62, %v835, %v834
    %v838 = vstv %s825
    %v839 = vstv %s830
    %v840 = vsel %vm62, %v838, %v839
    %v841 = vstv %s828
    %v842 = vstv %s833
    %v843 = vsel %vm62, %v841, %v842
    %v844 = vsub.f32 %v475, %v836
    %v845 = vsub.f32 %v479, %v836
    %v846 = vmul.f32 %v840, %v844
    %v847 = vmul.f32 %v840, %v845
    %v848 = vsub.f32 %v693, %v837
    %v849 = vsub.f32 %v695, %v837
    %v850 = vmul.f32 %v843, %v848
    %v851 = vmul.f32 %v843, %v849
    %v852 = vadd.f32 %v846, %v850
    %v853 = vadd.f32 %v847, %v851
    %v854 = vadd.f32 %v852, %v679
    %v855 = vadd.f32 %v853, %v679
    %v856 = vadd.f32 %v690, %v854
    %v857 = vadd.f32 %v691, %v855
    %v858 = vmul.f32 %v856, 0.5
    %v859 = vmul.f32 %v857, 0.5
    %v860 = vtanh.pop %v858
    %v861 = vtanh.pop %v859
    %v862 = vmul.f32 %v860, 0.5
    %v863 = vmul.f32 %v861, 0.5
    %v864 = vadd.f32 %v862, 0.5
    %v865 = vadd.f32 %v863, 0.5
    %866 = vrot.lane.b32.xlu0 %v477, 64
    %v867 = vpop.permute.xlu0 %866
    %868 = vrot.lane.b32.xlu0 %v481, 64
    %v869 = vpop.permute.xlu0 %868
    %v870 = vadd.f32 %v477, %v481
    %v871 = vrot.slane %v870, 4
    %v872 = vadd.f32 %v870, %v871
    %v873 = vrot.slane %v872, 2
    %v874 = vadd.f32 %v872, %v873
    %v875 = vrot.slane %v874, 1
    %v876 = vadd.f32 %v874, %v875
    %v877 = vmul.f32 %v477, %v477
    %v878 = vmul.f32 %v481, %v481
    %v879 = vadd.f32 %v877, %v878
    %v880 = vrot.slane %v879, 4
    %v881 = vadd.f32 %v879, %v880
    %v882 = vrot.slane %v881, 2
    %v883 = vadd.f32 %v881, %v882
    %v884 = vrot.slane %v883, 1
    %v885 = vadd.f32 %v883, %v884
    %v886 = vmul.f32 %v477, %v867
    %v887 = vmul.f32 %v481, %v869
    %v888 = vadd.f32 %v886, %v887
    %v889 = vrot.slane %v888, 4
    %v890 = vadd.f32 %v888, %v889
    %v891 = vrot.slane %v890, 2
    %v892 = vadd.f32 %v890, %v891
    %v893 = vrot.slane %v892, 1
    %v894 = vadd.f32 %v892, %v893
    %v895 = vsel %vm62, %v876, 0.0
    %v896 = vsel %vm554, %v895, 0.0
    %897 = vadd.xlane.f32.xlu0 %v896
    %v898 = vpop.xlane.xlu0 %897
    %v899 = vrot.slane %v898, 4
    %v900 = vadd.f32 %v898, %v899
    %v901 = vrot.slane %v900, 2
    %v902 = vadd.f32 %v900, %v901
    %v903 = vrot.slane %v902, 1
    %v904 = vadd.f32 %v902, %v903
    %s905 = vtos %v904
    %v906 = vsel %vm554, %v876, 0.0
    %907 = vadd.xlane.f32.xlu0 %v906
    %v908 = vpop.xlane.xlu0 %907
    %v909 = vrot.slane %v908, 4
    %v910 = vadd.f32 %v908, %v909
    %v911 = vrot.slane %v910, 2
    %v912 = vadd.f32 %v910, %v911
    %v913 = vrot.slane %v912, 1
    %v914 = vadd.f32 %v912, %v913
    %s915 = vtos %v914
    %s916 = ssub.f32 %s915, %s905
    %v917 = vsel %vm62, %v885, 0.0
    %v918 = vsel %vm554, %v917, 0.0
    %919 = vadd.xlane.f32.xlu0 %v918
    %v920 = vpop.xlane.xlu0 %919
    %v921 = vrot.slane %v920, 4
    %v922 = vadd.f32 %v920, %v921
    %v923 = vrot.slane %v922, 2
    %v924 = vadd.f32 %v922, %v923
    %v925 = vrot.slane %v924, 1
    %v926 = vadd.f32 %v924, %v925
    %s927 = vtos %v926
    %v928 = vsel %vm554, %v885, 0.0
    %929 = vadd.xlane.f32.xlu0 %v928
    %v930 = vpop.xlane.xlu0 %929
    %v931 = vrot.slane %v930, 4
    %v932 = vadd.f32 %v930, %v931
    %v933 = vrot.slane %v932, 2
    %v934 = vadd.f32 %v932, %v933
    %v935 = vrot.slane %v934, 1
    %v936 = vadd.f32 %v934, %v935
    %s937 = vtos %v936
    %s938 = ssub.f32 %s937, %s927
    %v939 = vsel %vm554, %v894, 0.0
    %940 = vadd.xlane.f32.xlu0 %v939
    %v941 = vpop.xlane.xlu0 %940
    %v942 = vrot.slane %v941, 4
    %v943 = vadd.f32 %v941, %v942
    %v944 = vrot.slane %v943, 2
    %v945 = vadd.f32 %v943, %v944
    %v946 = vrot.slane %v945, 1
    %v947 = vadd.f32 %v945, %v946
    %s948 = vtos %v947
    %s949 = smul.f32 %s948, 0.5
    %s950 = smul.f32 %s905, 0.0009765625
    %s951 = smul.f32 %s916, 0.0009765625
    %s952 = smul.f32 %s927, 0.0009765625
    %s953 = smul.f32 %s950, %s950
    %s954 = ssub.f32 %s952, %s953
    %s955 = sadd.f32 %s954, %s54
    %s956 = smul.f32 %s938, 0.0009765625
    %s957 = smul.f32 %s951, %s951
    %s958 = ssub.f32 %s956, %s957
    %s959 = sadd.f32 %s958, %s54
    %s960 = smul.f32 %s949, 0.0009765625
    %s961 = smul.f32 %s950, %s951
    %s962 = ssub.f32 %s960, %s961
    %s963 = smul.f32 %s955, %s959
    %s964 = smul.f32 %s962, %s962
    %s965 = ssub.f32 %s963, %s964
    %v966 = vstv %s965
    %v967 = vrsqrt.pop %v966
    %v968 = vmul.f32 %v966, %v967
    %vm969 = vcmp.eq.f32.partialorder %v966, inf
    %v970 = vsel %vm969, %v966, %v968
    %vm971 = vcmp.eq.f32.partialorder %v966, 0.0
    %v972 = vand.u32 %v966, 2147483648
    %v973 = vsel %vm971, %v972, %v970
    %s974 = vtos %v973
    %s975 = sadd.f32 %s955, %s959
    %s976 = smul.f32 %s974, 2.0
    %s977 = sadd.f32 %s975, %s976
    %v978 = vstv %s977
    %v979 = vrsqrt.pop %v978
    %v980 = vmul.f32 %v978, %v979
    %vm981 = vcmp.eq.f32.partialorder %v978, inf
    %v982 = vsel %vm981, %v978, %v980
    %vm983 = vcmp.eq.f32.partialorder %v978, 0.0
    %v984 = vand.u32 %v978, 2147483648
    %v985 = vsel %vm983, %v984, %v982
    %s986 = vtos %v985
    %s987 = smul.f32 %s974, %s986
    %v988 = vstv %s987
    %v989 = vrcp.pop %v988
    %s990 = vtos %v989
    %s991 = sadd.f32 %s959, %s974
    %s992 = smul.f32 %s991, %s990
    %s993 = sadd.f32 %s955, %s974
    %s994 = smul.f32 %s993, %s990
    %s995 = ssub.f32 0.0, %s962
    %s996 = smul.f32 %s995, %s990
    %s997 = smul.f32 %s55, %s992
    %s998 = smul.f32 %s57, %s996
    %s999 = sadd.f32 %s997, %s998
    %s1000 = smul.f32 %s55, %s996
    %s1001 = smul.f32 %s57, %s994
    %s1002 = sadd.f32 %s1000, %s1001
    %s1003 = smul.f32 %s56, %s994
    %s1004 = sadd.f32 %s998, %s1003
    %s1005 = smul.f32 %s57, %s992
    %s1006 = smul.f32 %s56, %s996
    %s1007 = sadd.f32 %s1005, %s1006
    %v1008 = vstv %s950
    %v1009 = vstv %s951
    %v1010 = vsel %vm62, %v1008, %v1009
    %v1011 = vsel %vm62, %v1009, %v1008
    %v1012 = vstv %s999
    %v1013 = vstv %s1004
    %v1014 = vsel %vm62, %v1012, %v1013
    %v1015 = vstv %s1002
    %v1016 = vstv %s1007
    %v1017 = vsel %vm62, %v1015, %v1016
    %v1018 = vsub.f32 %v477, %v1010
    %v1019 = vsub.f32 %v481, %v1010
    %v1020 = vmul.f32 %v1014, %v1018
    %v1021 = vmul.f32 %v1014, %v1019
    %v1022 = vsub.f32 %v867, %v1011
    %v1023 = vsub.f32 %v869, %v1011
    %v1024 = vmul.f32 %v1017, %v1022
    %v1025 = vmul.f32 %v1017, %v1023
    %v1026 = vadd.f32 %v1020, %v1024
    %v1027 = vadd.f32 %v1021, %v1025
    %v1028 = vadd.f32 %v1026, %v679
    %v1029 = vadd.f32 %v1027, %v679
    %1030 = vrot.lane.b32.xlu0 %v208, 64
    %v1031 = vpop.permute.xlu0 %1030
    %1032 = vrot.lane.b32.xlu0 %v212, 64
    %v1033 = vpop.permute.xlu0 %1032
    %v1034 = vadd.f32 %v208, %v212
    %v1035 = vrot.slane %v1034, 4
    %v1036 = vadd.f32 %v1034, %v1035
    %v1037 = vrot.slane %v1036, 2
    %v1038 = vadd.f32 %v1036, %v1037
    %v1039 = vrot.slane %v1038, 1
    %v1040 = vadd.f32 %v1038, %v1039
    %v1041 = vmul.f32 %v208, %v208
    %v1042 = vmul.f32 %v212, %v212
    %v1043 = vadd.f32 %v1041, %v1042
    %v1044 = vrot.slane %v1043, 4
    %v1045 = vadd.f32 %v1043, %v1044
    %v1046 = vrot.slane %v1045, 2
    %v1047 = vadd.f32 %v1045, %v1046
    %v1048 = vrot.slane %v1047, 1
    %v1049 = vadd.f32 %v1047, %v1048
    %v1050 = vmul.f32 %v208, %v1031
    %v1051 = vmul.f32 %v212, %v1033
    %v1052 = vadd.f32 %v1050, %v1051
    %v1053 = vrot.slane %v1052, 4
    %v1054 = vadd.f32 %v1052, %v1053
    %v1055 = vrot.slane %v1054, 2
    %v1056 = vadd.f32 %v1054, %v1055
    %v1057 = vrot.slane %v1056, 1
    %v1058 = vadd.f32 %v1056, %v1057
    %v1059 = vsel %vm62, %v1040, 0.0
    %v1060 = vsel %vm554, %v1059, 0.0
    %1061 = vadd.xlane.f32.xlu0 %v1060
    %v1062 = vpop.xlane.xlu0 %1061
    %v1063 = vrot.slane %v1062, 4
    %v1064 = vadd.f32 %v1062, %v1063
    %v1065 = vrot.slane %v1064, 2
    %v1066 = vadd.f32 %v1064, %v1065
    %v1067 = vrot.slane %v1066, 1
    %v1068 = vadd.f32 %v1066, %v1067
    %s1069 = vtos %v1068
    %v1070 = vsel %vm554, %v1040, 0.0
    %1071 = vadd.xlane.f32.xlu0 %v1070
    %v1072 = vpop.xlane.xlu0 %1071
    %v1073 = vrot.slane %v1072, 4
    %v1074 = vadd.f32 %v1072, %v1073
    %v1075 = vrot.slane %v1074, 2
    %v1076 = vadd.f32 %v1074, %v1075
    %v1077 = vrot.slane %v1076, 1
    %v1078 = vadd.f32 %v1076, %v1077
    %s1079 = vtos %v1078
    %s1080 = ssub.f32 %s1079, %s1069
    %v1081 = vsel %vm62, %v1049, 0.0
    %v1082 = vsel %vm554, %v1081, 0.0
    %1083 = vadd.xlane.f32.xlu0 %v1082
    %v1084 = vpop.xlane.xlu0 %1083
    %v1085 = vrot.slane %v1084, 4
    %v1086 = vadd.f32 %v1084, %v1085
    %v1087 = vrot.slane %v1086, 2
    %v1088 = vadd.f32 %v1086, %v1087
    %v1089 = vrot.slane %v1088, 1
    %v1090 = vadd.f32 %v1088, %v1089
    %s1091 = vtos %v1090
    %v1092 = vsel %vm554, %v1049, 0.0
    %1093 = vadd.xlane.f32.xlu0 %v1092
    %v1094 = vpop.xlane.xlu0 %1093
    %v1095 = vrot.slane %v1094, 4
    %v1096 = vadd.f32 %v1094, %v1095
    %v1097 = vrot.slane %v1096, 2
    %v1098 = vadd.f32 %v1096, %v1097
    %v1099 = vrot.slane %v1098, 1
    %v1100 = vadd.f32 %v1098, %v1099
    %s1101 = vtos %v1100
    %s1102 = ssub.f32 %s1101, %s1091
    %v1103 = vsel %vm554, %v1058, 0.0
    %1104 = vadd.xlane.f32.xlu0 %v1103
    %v1105 = vpop.xlane.xlu0 %1104
    %v1106 = vrot.slane %v1105, 4
    %v1107 = vadd.f32 %v1105, %v1106
    %v1108 = vrot.slane %v1107, 2
    %v1109 = vadd.f32 %v1107, %v1108
    %v1110 = vrot.slane %v1109, 1
    %v1111 = vadd.f32 %v1109, %v1110
    %s1112 = vtos %v1111
    %s1113 = smul.f32 %s1112, 0.5
    %s1114 = smul.f32 %s1069, 0.0009765625
    %s1115 = smul.f32 %s1080, 0.0009765625
    %s1116 = smul.f32 %s1091, 0.0009765625
    %s1117 = smul.f32 %s1114, %s1114
    %s1118 = ssub.f32 %s1116, %s1117
    %s1119 = sadd.f32 %s1118, %s54
    %s1120 = smul.f32 %s1102, 0.0009765625
    %s1121 = smul.f32 %s1115, %s1115
    %s1122 = ssub.f32 %s1120, %s1121
    %s1123 = sadd.f32 %s1122, %s54
    %s1124 = smul.f32 %s1113, 0.0009765625
    %s1125 = smul.f32 %s1114, %s1115
    %s1126 = ssub.f32 %s1124, %s1125
    %s1127 = smul.f32 %s1119, %s1123
    %s1128 = smul.f32 %s1126, %s1126
    %s1129 = ssub.f32 %s1127, %s1128
    %v1130 = vstv %s1129
    %v1131 = vrsqrt.pop %v1130
    %v1132 = vmul.f32 %v1130, %v1131
    %vm1133 = vcmp.eq.f32.partialorder %v1130, inf
    %v1134 = vsel %vm1133, %v1130, %v1132
    %vm1135 = vcmp.eq.f32.partialorder %v1130, 0.0
    %v1136 = vand.u32 %v1130, 2147483648
    %v1137 = vsel %vm1135, %v1136, %v1134
    %s1138 = vtos %v1137
    %s1139 = sadd.f32 %s1119, %s1123
    %s1140 = smul.f32 %s1138, 2.0
    %s1141 = sadd.f32 %s1139, %s1140
    %v1142 = vstv %s1141
    %v1143 = vrsqrt.pop %v1142
    %v1144 = vmul.f32 %v1142, %v1143
    %vm1145 = vcmp.eq.f32.partialorder %v1142, inf
    %v1146 = vsel %vm1145, %v1142, %v1144
    %vm1147 = vcmp.eq.f32.partialorder %v1142, 0.0
    %v1148 = vand.u32 %v1142, 2147483648
    %v1149 = vsel %vm1147, %v1148, %v1146
    %s1150 = vtos %v1149
    %s1151 = smul.f32 %s1138, %s1150
    %v1152 = vstv %s1151
    %v1153 = vrcp.pop %v1152
    %s1154 = vtos %v1153
    %s1155 = sadd.f32 %s1123, %s1138
    %s1156 = smul.f32 %s1155, %s1154
    %s1157 = sadd.f32 %s1119, %s1138
    %s1158 = smul.f32 %s1157, %s1154
    %s1159 = ssub.f32 0.0, %s1126
    %s1160 = smul.f32 %s1159, %s1154
    %s1161 = smul.f32 %s55, %s1156
    %s1162 = smul.f32 %s57, %s1160
    %s1163 = sadd.f32 %s1161, %s1162
    %s1164 = smul.f32 %s55, %s1160
    %s1165 = smul.f32 %s57, %s1158
    %s1166 = sadd.f32 %s1164, %s1165
    %s1167 = smul.f32 %s56, %s1158
    %s1168 = sadd.f32 %s1162, %s1167
    %s1169 = smul.f32 %s57, %s1156
    %s1170 = smul.f32 %s56, %s1160
    %s1171 = sadd.f32 %s1169, %s1170
    %v1172 = vstv %s1114
    %v1173 = vstv %s1115
    %v1174 = vsel %vm62, %v1172, %v1173
    %v1175 = vsel %vm62, %v1173, %v1172
    %v1176 = vstv %s1163
    %v1177 = vstv %s1168
    %v1178 = vsel %vm62, %v1176, %v1177
    %v1179 = vstv %s1166
    %v1180 = vstv %s1171
    %v1181 = vsel %vm62, %v1179, %v1180
    %v1182 = vsub.f32 %v208, %v1174
    %v1183 = vsub.f32 %v212, %v1174
    %v1184 = vmul.f32 %v1178, %v1182
    %v1185 = vmul.f32 %v1178, %v1183
    %v1186 = vsub.f32 %v1031, %v1175
    %v1187 = vsub.f32 %v1033, %v1175
    %v1188 = vmul.f32 %v1181, %v1186
    %v1189 = vmul.f32 %v1181, %v1187
    %v1190 = vadd.f32 %v1184, %v1188
    %v1191 = vadd.f32 %v1185, %v1189
    %v1192 = vadd.f32 %v1190, %v679
    %v1193 = vadd.f32 %v1191, %v679
    %v1194 = vadd.f32 %v1028, %v1192
    %v1195 = vadd.f32 %v1029, %v1193
    %v1196 = vmul.f32 %v1194, 0.5
    %v1197 = vmul.f32 %v1195, 0.5
    %v1198 = vtanh.pop %v1196
    %v1199 = vtanh.pop %v1197
    %v1200 = vmul.f32 %v1198, 0.5
    %v1201 = vmul.f32 %v1199, 0.5
    %v1202 = vadd.f32 %v1200, 0.5
    %v1203 = vadd.f32 %v1201, 0.5
    %1204 = vrot.lane.b32.xlu0 %v249, 64
    %v1205 = vpop.permute.xlu0 %1204
    %1206 = vrot.lane.b32.xlu0 %v252, 64
    %v1207 = vpop.permute.xlu0 %1206
    %v1208 = vadd.f32 %v249, %v252
    %v1209 = vrot.slane %v1208, 4
    %v1210 = vadd.f32 %v1208, %v1209
    %v1211 = vrot.slane %v1210, 2
    %v1212 = vadd.f32 %v1210, %v1211
    %v1213 = vrot.slane %v1212, 1
    %v1214 = vadd.f32 %v1212, %v1213
    %v1215 = vmul.f32 %v249, %v249
    %v1216 = vmul.f32 %v252, %v252
    %v1217 = vadd.f32 %v1215, %v1216
    %v1218 = vrot.slane %v1217, 4
    %v1219 = vadd.f32 %v1217, %v1218
    %v1220 = vrot.slane %v1219, 2
    %v1221 = vadd.f32 %v1219, %v1220
    %v1222 = vrot.slane %v1221, 1
    %v1223 = vadd.f32 %v1221, %v1222
    %v1224 = vmul.f32 %v249, %v1205
    %v1225 = vmul.f32 %v252, %v1207
    %v1226 = vadd.f32 %v1224, %v1225
    %v1227 = vrot.slane %v1226, 4
    %v1228 = vadd.f32 %v1226, %v1227
    %v1229 = vrot.slane %v1228, 2
    %v1230 = vadd.f32 %v1228, %v1229
    %v1231 = vrot.slane %v1230, 1
    %v1232 = vadd.f32 %v1230, %v1231
    %v1233 = vsel %vm62, %v1214, 0.0
    %v1234 = vsel %vm554, %v1233, 0.0
    %1235 = vadd.xlane.f32.xlu0 %v1234
    %v1236 = vpop.xlane.xlu0 %1235
    %v1237 = vrot.slane %v1236, 4
    %v1238 = vadd.f32 %v1236, %v1237
    %v1239 = vrot.slane %v1238, 2
    %v1240 = vadd.f32 %v1238, %v1239
    %v1241 = vrot.slane %v1240, 1
    %v1242 = vadd.f32 %v1240, %v1241
    %s1243 = vtos %v1242
    %v1244 = vsel %vm554, %v1214, 0.0
    %1245 = vadd.xlane.f32.xlu0 %v1244
    %v1246 = vpop.xlane.xlu0 %1245
    %v1247 = vrot.slane %v1246, 4
    %v1248 = vadd.f32 %v1246, %v1247
    %v1249 = vrot.slane %v1248, 2
    %v1250 = vadd.f32 %v1248, %v1249
    %v1251 = vrot.slane %v1250, 1
    %v1252 = vadd.f32 %v1250, %v1251
    %s1253 = vtos %v1252
    %s1254 = ssub.f32 %s1253, %s1243
    %v1255 = vsel %vm62, %v1223, 0.0
    %v1256 = vsel %vm554, %v1255, 0.0
    %1257 = vadd.xlane.f32.xlu0 %v1256
    %v1258 = vpop.xlane.xlu0 %1257
    %v1259 = vrot.slane %v1258, 4
    %v1260 = vadd.f32 %v1258, %v1259
    %v1261 = vrot.slane %v1260, 2
    %v1262 = vadd.f32 %v1260, %v1261
    %v1263 = vrot.slane %v1262, 1
    %v1264 = vadd.f32 %v1262, %v1263
    %s1265 = vtos %v1264
    %v1266 = vsel %vm554, %v1223, 0.0
    %1267 = vadd.xlane.f32.xlu0 %v1266
    %v1268 = vpop.xlane.xlu0 %1267
    %v1269 = vrot.slane %v1268, 4
    %v1270 = vadd.f32 %v1268, %v1269
    %v1271 = vrot.slane %v1270, 2
    %v1272 = vadd.f32 %v1270, %v1271
    %v1273 = vrot.slane %v1272, 1
    %v1274 = vadd.f32 %v1272, %v1273
    %s1275 = vtos %v1274
    %s1276 = ssub.f32 %s1275, %s1265
    %v1277 = vsel %vm554, %v1232, 0.0
    %1278 = vadd.xlane.f32.xlu0 %v1277
    %v1279 = vpop.xlane.xlu0 %1278
    %v1280 = vrot.slane %v1279, 4
    %v1281 = vadd.f32 %v1279, %v1280
    %v1282 = vrot.slane %v1281, 2
    %v1283 = vadd.f32 %v1281, %v1282
    %v1284 = vrot.slane %v1283, 1
    %v1285 = vadd.f32 %v1283, %v1284
    %s1286 = vtos %v1285
    %s1287 = smul.f32 %s1286, 0.5
    %s1288 = smul.f32 %s1243, 0.0009765625
    %s1289 = smul.f32 %s1254, 0.0009765625
    %s1290 = smul.f32 %s1265, 0.0009765625
    %s1291 = smul.f32 %s1288, %s1288
    %s1292 = ssub.f32 %s1290, %s1291
    %s1293 = sadd.f32 %s1292, %s54
    %s1294 = smul.f32 %s1276, 0.0009765625
    %s1295 = smul.f32 %s1289, %s1289
    %s1296 = ssub.f32 %s1294, %s1295
    %s1297 = sadd.f32 %s1296, %s54
    %s1298 = smul.f32 %s1287, 0.0009765625
    %s1299 = smul.f32 %s1288, %s1289
    %s1300 = ssub.f32 %s1298, %s1299
    %s1301 = smul.f32 %s1293, %s1297
    %s1302 = smul.f32 %s1300, %s1300
    %s1303 = ssub.f32 %s1301, %s1302
    %v1304 = vstv %s1303
    %v1305 = vrsqrt.pop %v1304
    %v1306 = vmul.f32 %v1304, %v1305
    %vm1307 = vcmp.eq.f32.partialorder %v1304, inf
    %v1308 = vsel %vm1307, %v1304, %v1306
    %vm1309 = vcmp.eq.f32.partialorder %v1304, 0.0
    %v1310 = vand.u32 %v1304, 2147483648
    %v1311 = vsel %vm1309, %v1310, %v1308
    %s1312 = vtos %v1311
    %s1313 = sadd.f32 %s1293, %s1297
    %s1314 = smul.f32 %s1312, 2.0
    %s1315 = sadd.f32 %s1313, %s1314
    %v1316 = vstv %s1315
    %v1317 = vrsqrt.pop %v1316
    %v1318 = vmul.f32 %v1316, %v1317
    %vm1319 = vcmp.eq.f32.partialorder %v1316, inf
    %v1320 = vsel %vm1319, %v1316, %v1318
    %vm1321 = vcmp.eq.f32.partialorder %v1316, 0.0
    %v1322 = vand.u32 %v1316, 2147483648
    %v1323 = vsel %vm1321, %v1322, %v1320
    %s1324 = vtos %v1323
    %s1325 = smul.f32 %s1312, %s1324
    %v1326 = vstv %s1325
    %v1327 = vrcp.pop %v1326
    %s1328 = vtos %v1327
    %s1329 = sadd.f32 %s1297, %s1312
    %s1330 = smul.f32 %s1329, %s1328
    %s1331 = sadd.f32 %s1293, %s1312
    %s1332 = smul.f32 %s1331, %s1328
    %s1333 = ssub.f32 0.0, %s1300
    %s1334 = smul.f32 %s1333, %s1328
    %s1335 = smul.f32 %s55, %s1330
    %s1336 = smul.f32 %s57, %s1334
    %s1337 = sadd.f32 %s1335, %s1336
    %s1338 = smul.f32 %s55, %s1334
    %s1339 = smul.f32 %s57, %s1332
    %s1340 = sadd.f32 %s1338, %s1339
    %s1341 = smul.f32 %s56, %s1332
    %s1342 = sadd.f32 %s1336, %s1341
    %s1343 = smul.f32 %s57, %s1330
    %s1344 = smul.f32 %s56, %s1334
    %s1345 = sadd.f32 %s1343, %s1344
    %v1346 = vstv %s1288
    %v1347 = vstv %s1289
    %v1348 = vsel %vm62, %v1346, %v1347
    %v1349 = vsel %vm62, %v1347, %v1346
    %v1350 = vstv %s1337
    %v1351 = vstv %s1342
    %v1352 = vsel %vm62, %v1350, %v1351
    %v1353 = vstv %s1340
    %v1354 = vstv %s1345
    %v1355 = vsel %vm62, %v1353, %v1354
    %v1356 = vsub.f32 %v249, %v1348
    %v1357 = vsub.f32 %v252, %v1348
    %v1358 = vmul.f32 %v1352, %v1356
    %v1359 = vmul.f32 %v1352, %v1357
    %v1360 = vsub.f32 %v1205, %v1349
    %v1361 = vsub.f32 %v1207, %v1349
    %v1362 = vmul.f32 %v1355, %v1360
    %v1363 = vmul.f32 %v1355, %v1361
    %v1364 = vadd.f32 %v1358, %v1362
    %v1365 = vadd.f32 %v1359, %v1363
    %v1366 = vadd.f32 %v1364, %v679
    %v1367 = vadd.f32 %v1365, %v679
    %1368 = vrot.lane.b32.xlu0 %v518, 64
    %v1369 = vpop.permute.xlu0 %1368
    %1370 = vrot.lane.b32.xlu0 %v521, 64
    %v1371 = vpop.permute.xlu0 %1370
    %v1372 = vadd.f32 %v518, %v521
    %v1373 = vrot.slane %v1372, 4
    %v1374 = vadd.f32 %v1372, %v1373
    %v1375 = vrot.slane %v1374, 2
    %v1376 = vadd.f32 %v1374, %v1375
    %v1377 = vrot.slane %v1376, 1
    %v1378 = vadd.f32 %v1376, %v1377
    %v1379 = vmul.f32 %v518, %v518
    %v1380 = vmul.f32 %v521, %v521
    %v1381 = vadd.f32 %v1379, %v1380
    %v1382 = vrot.slane %v1381, 4
    %v1383 = vadd.f32 %v1381, %v1382
    %v1384 = vrot.slane %v1383, 2
    %v1385 = vadd.f32 %v1383, %v1384
    %v1386 = vrot.slane %v1385, 1
    %v1387 = vadd.f32 %v1385, %v1386
    %v1388 = vmul.f32 %v518, %v1369
    %v1389 = vmul.f32 %v521, %v1371
    %v1390 = vadd.f32 %v1388, %v1389
    %v1391 = vrot.slane %v1390, 4
    %v1392 = vadd.f32 %v1390, %v1391
    %v1393 = vrot.slane %v1392, 2
    %v1394 = vadd.f32 %v1392, %v1393
    %v1395 = vrot.slane %v1394, 1
    %v1396 = vadd.f32 %v1394, %v1395
    %v1397 = vsel %vm62, %v1378, 0.0
    %v1398 = vsel %vm554, %v1397, 0.0
    %1399 = vadd.xlane.f32.xlu0 %v1398
    %v1400 = vpop.xlane.xlu0 %1399
    %v1401 = vrot.slane %v1400, 4
    %v1402 = vadd.f32 %v1400, %v1401
    %v1403 = vrot.slane %v1402, 2
    %v1404 = vadd.f32 %v1402, %v1403
    %v1405 = vrot.slane %v1404, 1
    %v1406 = vadd.f32 %v1404, %v1405
    %s1407 = vtos %v1406
    %v1408 = vsel %vm554, %v1378, 0.0
    %1409 = vadd.xlane.f32.xlu0 %v1408
    %v1410 = vpop.xlane.xlu0 %1409
    %v1411 = vrot.slane %v1410, 4
    %v1412 = vadd.f32 %v1410, %v1411
    %v1413 = vrot.slane %v1412, 2
    %v1414 = vadd.f32 %v1412, %v1413
    %v1415 = vrot.slane %v1414, 1
    %v1416 = vadd.f32 %v1414, %v1415
    %s1417 = vtos %v1416
    %s1418 = ssub.f32 %s1417, %s1407
    %v1419 = vsel %vm62, %v1387, 0.0
    %v1420 = vsel %vm554, %v1419, 0.0
    %1421 = vadd.xlane.f32.xlu0 %v1420
    %v1422 = vpop.xlane.xlu0 %1421
    %v1423 = vrot.slane %v1422, 4
    %v1424 = vadd.f32 %v1422, %v1423
    %v1425 = vrot.slane %v1424, 2
    %v1426 = vadd.f32 %v1424, %v1425
    %v1427 = vrot.slane %v1426, 1
    %v1428 = vadd.f32 %v1426, %v1427
    %s1429 = vtos %v1428
    %v1430 = vsel %vm554, %v1387, 0.0
    %1431 = vadd.xlane.f32.xlu0 %v1430
    %v1432 = vpop.xlane.xlu0 %1431
    %v1433 = vrot.slane %v1432, 4
    %v1434 = vadd.f32 %v1432, %v1433
    %v1435 = vrot.slane %v1434, 2
    %v1436 = vadd.f32 %v1434, %v1435
    %v1437 = vrot.slane %v1436, 1
    %v1438 = vadd.f32 %v1436, %v1437
    %s1439 = vtos %v1438
    %s1440 = ssub.f32 %s1439, %s1429
    %v1441 = vsel %vm554, %v1396, 0.0
    %1442 = vadd.xlane.f32.xlu0 %v1441
    %v1443 = vpop.xlane.xlu0 %1442
    %v1444 = vrot.slane %v1443, 4
    %v1445 = vadd.f32 %v1443, %v1444
    %v1446 = vrot.slane %v1445, 2
    %v1447 = vadd.f32 %v1445, %v1446
    %v1448 = vrot.slane %v1447, 1
    %v1449 = vadd.f32 %v1447, %v1448
    %s1450 = vtos %v1449
    %s1451 = smul.f32 %s1450, 0.5
    %s1452 = smul.f32 %s1407, 0.0009765625
    %s1453 = smul.f32 %s1418, 0.0009765625
    %s1454 = smul.f32 %s1429, 0.0009765625
    %s1455 = smul.f32 %s1452, %s1452
    %s1456 = ssub.f32 %s1454, %s1455
    %s1457 = sadd.f32 %s1456, %s54
    %s1458 = smul.f32 %s1440, 0.0009765625
    %s1459 = smul.f32 %s1453, %s1453
    %s1460 = ssub.f32 %s1458, %s1459
    %s1461 = sadd.f32 %s1460, %s54
    %s1462 = smul.f32 %s1451, 0.0009765625
    %s1463 = smul.f32 %s1452, %s1453
    %s1464 = ssub.f32 %s1462, %s1463
    %s1465 = smul.f32 %s1457, %s1461
    %s1466 = smul.f32 %s1464, %s1464
    %s1467 = ssub.f32 %s1465, %s1466
    %v1468 = vstv %s1467
    %v1469 = vrsqrt.pop %v1468
    %v1470 = vmul.f32 %v1468, %v1469
    %vm1471 = vcmp.eq.f32.partialorder %v1468, inf
    %v1472 = vsel %vm1471, %v1468, %v1470
    %vm1473 = vcmp.eq.f32.partialorder %v1468, 0.0
    %v1474 = vand.u32 %v1468, 2147483648
    %v1475 = vsel %vm1473, %v1474, %v1472
    %s1476 = vtos %v1475
    %s1477 = sadd.f32 %s1457, %s1461
    %s1478 = smul.f32 %s1476, 2.0
    %s1479 = sadd.f32 %s1477, %s1478
    %v1480 = vstv %s1479
    %v1481 = vrsqrt.pop %v1480
    %v1482 = vmul.f32 %v1480, %v1481
    %vm1483 = vcmp.eq.f32.partialorder %v1480, inf
    %v1484 = vsel %vm1483, %v1480, %v1482
    %vm1485 = vcmp.eq.f32.partialorder %v1480, 0.0
    %v1486 = vand.u32 %v1480, 2147483648
    %v1487 = vsel %vm1485, %v1486, %v1484
    %s1488 = vtos %v1487
    %s1489 = smul.f32 %s1476, %s1488
    %v1490 = vstv %s1489
    %v1491 = vrcp.pop %v1490
    %s1492 = vtos %v1491
    %s1493 = sadd.f32 %s1461, %s1476
    %s1494 = smul.f32 %s1493, %s1492
    %s1495 = sadd.f32 %s1457, %s1476
    %s1496 = smul.f32 %s1495, %s1492
    %s1497 = ssub.f32 0.0, %s1464
    %s1498 = smul.f32 %s1497, %s1492
    %s1499 = smul.f32 %s55, %s1494
    %s1500 = smul.f32 %s57, %s1498
    %s1501 = sadd.f32 %s1499, %s1500
    %s1502 = smul.f32 %s55, %s1498
    %s1503 = smul.f32 %s57, %s1496
    %s1504 = sadd.f32 %s1502, %s1503
    %s1505 = smul.f32 %s56, %s1496
    %s1506 = sadd.f32 %s1500, %s1505
    %s1507 = smul.f32 %s57, %s1494
    %s1508 = smul.f32 %s56, %s1498
    %s1509 = sadd.f32 %s1507, %s1508
    %v1510 = vstv %s1452
    %v1511 = vstv %s1453
    %v1512 = vsel %vm62, %v1510, %v1511
    %v1513 = vsel %vm62, %v1511, %v1510
    %v1514 = vstv %s1501
    %v1515 = vstv %s1506
    %v1516 = vsel %vm62, %v1514, %v1515
    %v1517 = vstv %s1504
    %v1518 = vstv %s1509
    %v1519 = vsel %vm62, %v1517, %v1518
    %v1520 = vsub.f32 %v518, %v1512
    %v1521 = vsub.f32 %v521, %v1512
    %v1522 = vmul.f32 %v1516, %v1520
    %v1523 = vmul.f32 %v1516, %v1521
    %v1524 = vsub.f32 %v1369, %v1513
    %v1525 = vsub.f32 %v1371, %v1513
    %v1526 = vmul.f32 %v1519, %v1524
    %v1527 = vmul.f32 %v1519, %v1525
    %v1528 = vadd.f32 %v1522, %v1526
    %v1529 = vadd.f32 %v1523, %v1527
    %v1530 = vadd.f32 %v1528, %v679
    %v1531 = vadd.f32 %v1529, %v679
    %1532 = vrot.lane.b32.xlu0 %v864, 64
    %v1533 = vpop.permute.xlu0 %1532
    %1534 = vrot.lane.b32.xlu0 %v865, 64
    %v1535 = vpop.permute.xlu0 %1534
    %1536 = vrot.lane.b32.xlu0 %v1530, 64
    %v1537 = vpop.permute.xlu0 %1536
    %1538 = vrot.lane.b32.xlu0 %v1531, 64
    %v1539 = vpop.permute.xlu0 %1538
    %v1540 = vsel %vm62, 1, 0
    %vm1541 = vcmp.eq.s32.totalorder %v1540, 1
    %v1542 = vsel %vm1541, %v864, %v1533
    %v1543 = vsel %vm1541, %v865, %v1535
    %v1544 = vsel %vm1541, %v1533, %v864
    %v1545 = vsel %vm1541, %v1535, %v865
    %v1546 = vsel %vm62, -1.0, 1.0
    %v1547 = vmul.f32 %v1542, %v1530
    %v1548 = vmul.f32 %v1543, %v1531
    %v1549 = vmul.f32 %v1537, %v1546
    %v1550 = vmul.f32 %v1539, %v1546
    %v1551 = vmul.f32 %v1544, %v1549
    %v1552 = vmul.f32 %v1545, %v1550
    %v1553 = vadd.f32 %v1547, %v1551
    %v1554 = vadd.f32 %v1548, %v1552
    %v1555 = vadd.f32 %v1366, %v1553
    %v1556 = vadd.f32 %v1367, %v1554
    %1557 = vrot.lane.b32.xlu0 %v1555, 64
    %v1558 = vpop.permute.xlu0 %1557
    %1559 = vrot.lane.b32.xlu0 %v1556, 64
    %v1560 = vpop.permute.xlu0 %1559
    %v1561 = vadd.f32 %v1555, %v1556
    %v1562 = vrot.slane %v1561, 4
    %v1563 = vadd.f32 %v1561, %v1562
    %v1564 = vrot.slane %v1563, 2
    %v1565 = vadd.f32 %v1563, %v1564
    %v1566 = vrot.slane %v1565, 1
    %v1567 = vadd.f32 %v1565, %v1566
    %v1568 = vmul.f32 %v1555, %v1555
    %v1569 = vmul.f32 %v1556, %v1556
    %v1570 = vadd.f32 %v1568, %v1569
    %v1571 = vrot.slane %v1570, 4
    %v1572 = vadd.f32 %v1570, %v1571
    %v1573 = vrot.slane %v1572, 2
    %v1574 = vadd.f32 %v1572, %v1573
    %v1575 = vrot.slane %v1574, 1
    %v1576 = vadd.f32 %v1574, %v1575
    %v1577 = vmul.f32 %v1555, %v1558
    %v1578 = vmul.f32 %v1556, %v1560
    %v1579 = vadd.f32 %v1577, %v1578
    %v1580 = vrot.slane %v1579, 4
    %v1581 = vadd.f32 %v1579, %v1580
    %v1582 = vrot.slane %v1581, 2
    %v1583 = vadd.f32 %v1581, %v1582
    %v1584 = vrot.slane %v1583, 1
    %v1585 = vadd.f32 %v1583, %v1584
    %v1586 = vsel %vm62, %v1567, 0.0
    %v1587 = vsel %vm554, %v1586, 0.0
    %1588 = vadd.xlane.f32.xlu0 %v1587
    %v1589 = vpop.xlane.xlu0 %1588
    %v1590 = vrot.slane %v1589, 4
    %v1591 = vadd.f32 %v1589, %v1590
    %v1592 = vrot.slane %v1591, 2
    %v1593 = vadd.f32 %v1591, %v1592
    %v1594 = vrot.slane %v1593, 1
    %v1595 = vadd.f32 %v1593, %v1594
    %s1596 = vtos %v1595
    %v1597 = vsel %vm554, %v1567, 0.0
    %1598 = vadd.xlane.f32.xlu0 %v1597
    %v1599 = vpop.xlane.xlu0 %1598
    %v1600 = vrot.slane %v1599, 4
    %v1601 = vadd.f32 %v1599, %v1600
    %v1602 = vrot.slane %v1601, 2
    %v1603 = vadd.f32 %v1601, %v1602
    %v1604 = vrot.slane %v1603, 1
    %v1605 = vadd.f32 %v1603, %v1604
    %s1606 = vtos %v1605
    %s1607 = ssub.f32 %s1606, %s1596
    %v1608 = vsel %vm62, %v1576, 0.0
    %v1609 = vsel %vm554, %v1608, 0.0
    %1610 = vadd.xlane.f32.xlu0 %v1609
    %v1611 = vpop.xlane.xlu0 %1610
    %v1612 = vrot.slane %v1611, 4
    %v1613 = vadd.f32 %v1611, %v1612
    %v1614 = vrot.slane %v1613, 2
    %v1615 = vadd.f32 %v1613, %v1614
    %v1616 = vrot.slane %v1615, 1
    %v1617 = vadd.f32 %v1615, %v1616
    %s1618 = vtos %v1617
    %v1619 = vsel %vm554, %v1576, 0.0
    %1620 = vadd.xlane.f32.xlu0 %v1619
    %v1621 = vpop.xlane.xlu0 %1620
    %v1622 = vrot.slane %v1621, 4
    %v1623 = vadd.f32 %v1621, %v1622
    %v1624 = vrot.slane %v1623, 2
    %v1625 = vadd.f32 %v1623, %v1624
    %v1626 = vrot.slane %v1625, 1
    %v1627 = vadd.f32 %v1625, %v1626
    %s1628 = vtos %v1627
    %s1629 = ssub.f32 %s1628, %s1618
    %v1630 = vsel %vm554, %v1585, 0.0
    %1631 = vadd.xlane.f32.xlu0 %v1630
    %v1632 = vpop.xlane.xlu0 %1631
    %v1633 = vrot.slane %v1632, 4
    %v1634 = vadd.f32 %v1632, %v1633
    %v1635 = vrot.slane %v1634, 2
    %v1636 = vadd.f32 %v1634, %v1635
    %v1637 = vrot.slane %v1636, 1
    %v1638 = vadd.f32 %v1636, %v1637
    %s1639 = vtos %v1638
    %s1640 = smul.f32 %s1639, 0.5
    %s1641 = smul.f32 %s1596, 0.0009765625
    %s1642 = smul.f32 %s1607, 0.0009765625
    %s1643 = smul.f32 %s1618, 0.0009765625
    %s1644 = smul.f32 %s1641, %s1641
    %s1645 = ssub.f32 %s1643, %s1644
    %s1646 = sadd.f32 %s1645, %s54
    %s1647 = smul.f32 %s1629, 0.0009765625
    %s1648 = smul.f32 %s1642, %s1642
    %s1649 = ssub.f32 %s1647, %s1648
    %s1650 = sadd.f32 %s1649, %s54
    %s1651 = smul.f32 %s1640, 0.0009765625
    %s1652 = smul.f32 %s1641, %s1642
    %s1653 = ssub.f32 %s1651, %s1652
    %s1654 = smul.f32 %s1646, %s1650
    %s1655 = smul.f32 %s1653, %s1653
    %s1656 = ssub.f32 %s1654, %s1655
    %v1657 = vstv %s1656
    %v1658 = vrsqrt.pop %v1657
    %v1659 = vmul.f32 %v1657, %v1658
    %vm1660 = vcmp.eq.f32.partialorder %v1657, inf
    %v1661 = vsel %vm1660, %v1657, %v1659
    %vm1662 = vcmp.eq.f32.partialorder %v1657, 0.0
    %v1663 = vand.u32 %v1657, 2147483648
    %v1664 = vsel %vm1662, %v1663, %v1661
    %s1665 = vtos %v1664
    %s1666 = sadd.f32 %s1646, %s1650
    %s1667 = smul.f32 %s1665, 2.0
    %s1668 = sadd.f32 %s1666, %s1667
    %v1669 = vstv %s1668
    %v1670 = vrsqrt.pop %v1669
    %v1671 = vmul.f32 %v1669, %v1670
    %vm1672 = vcmp.eq.f32.partialorder %v1669, inf
    %v1673 = vsel %vm1672, %v1669, %v1671
    %vm1674 = vcmp.eq.f32.partialorder %v1669, 0.0
    %v1675 = vand.u32 %v1669, 2147483648
    %v1676 = vsel %vm1674, %v1675, %v1673
    %s1677 = vtos %v1676
    %s1678 = smul.f32 %s1665, %s1677
    %v1679 = vstv %s1678
    %v1680 = vrcp.pop %v1679
    %s1681 = vtos %v1680
    %s1682 = sadd.f32 %s1650, %s1665
    %s1683 = smul.f32 %s1682, %s1681
    %s1684 = sadd.f32 %s1646, %s1665
    %s1685 = smul.f32 %s1684, %s1681
    %s1686 = ssub.f32 0.0, %s1653
    %s1687 = smul.f32 %s1686, %s1681
    %s1688 = smul.f32 %s55, %s1683
    %s1689 = smul.f32 %s57, %s1687
    %s1690 = sadd.f32 %s1688, %s1689
    %s1691 = smul.f32 %s55, %s1687
    %s1692 = smul.f32 %s57, %s1685
    %s1693 = sadd.f32 %s1691, %s1692
    %s1694 = smul.f32 %s56, %s1685
    %s1695 = sadd.f32 %s1689, %s1694
    %s1696 = smul.f32 %s57, %s1683
    %s1697 = smul.f32 %s56, %s1687
    %s1698 = sadd.f32 %s1696, %s1697
    %v1699 = vstv %s1641
    %v1700 = vstv %s1642
    %v1701 = vsel %vm62, %v1699, %v1700
    %v1702 = vsel %vm62, %v1700, %v1699
    %v1703 = vstv %s1690
    %v1704 = vstv %s1695
    %v1705 = vsel %vm62, %v1703, %v1704
    %v1706 = vstv %s1693
    %v1707 = vstv %s1698
    %v1708 = vsel %vm62, %v1706, %v1707
    %v1709 = vsub.f32 %v1555, %v1701
    %v1710 = vsub.f32 %v1556, %v1701
    %v1711 = vmul.f32 %v1705, %v1709
    %v1712 = vmul.f32 %v1705, %v1710
    %v1713 = vsub.f32 %v1558, %v1702
    %v1714 = vsub.f32 %v1560, %v1702
    %v1715 = vmul.f32 %v1708, %v1713
    %v1716 = vmul.f32 %v1708, %v1714
    %v1717 = vadd.f32 %v1711, %v1715
    %v1718 = vadd.f32 %v1712, %v1716
    %v1719 = vadd.f32 %v1717, %v679
    %v1720 = vadd.f32 %v1718, %v679
    %v1721 = vtanh.pop %v1719
    %v1722 = vtanh.pop %v1720
    %1723 = vst [vmem:[%s7] sm:$0xff] %v864
    %1724 = vst [vmem:[%s7 + $0x18] sm:$0xff] %v865
    %1725 = vst [vmem:[%s7 + $0x8] sm:$0xff] %v1202
    %1726 = vst [vmem:[%s7 + $0x20] sm:$0xff] %v1203
    %1727 = vst [vmem:[%s7 + $0x10] sm:$0xff] %v1721
    %1728 = vst [vmem:[%s7 + $0x28] sm:$0xff] %v1722
    // Predicated region
    $region38: #{complex_bn_gru_cell.1} parent=1 // pred_check
      _
    $region39: #{complex_bn_gru_cell.1} parent=1 // pred_check_branch
      %1730 = sbr.rel (0) target = $region41
    $region40: #{complex_bn_gru_cell.1} parent=1 // pred_region
      _
    $region41: #{complex_bn_gru_cell.1} parent=1 // pred_fallthru
      _
    // Predicated region
    $region42: #{complex_bn_gru_cell.1} parent=1 // pred_check
      _
    $region43: #{complex_bn_gru_cell.1} parent=1 // pred_check_branch
      %1732 = sbr.rel (0) target = $region45
    $region44: #{complex_bn_gru_cell.1} parent=1 // pred_region
      _
    $region45: #{complex_bn_gru_cell.1} parent=1 // pred_fallthru
      _
    %1733 = vsyncpa [#allocation3], 1
    %1734 = vsyncpa [#allocation4], 1

</llo_original>
